<compile_context>
chip_gen: v7x
topology: tpu7x:2x2x1
jax: 0.10.0
libtpu: 0.0.40
codegen_flags: <defaults>
</compile_context>

<pallas_src>
import math

import jax
import jax.numpy as jnp
from jax import lax
from jax.experimental import pallas as pl
from jax.experimental.pallas import tpu as pltpu


def _round_up(x, m):
    return ((x + m - 1) // m) * m


def _sinc(x):
    # sin(x)/x with the x == 0 limit handled (PyTorch would produce NaN there).
    safe = jnp.where(x == 0.0, 1.0, x)
    return jnp.where(x == 0.0, 1.0, jnp.sin(safe) / safe)


def sinc_filter_bank(filter_parameters, linear, window):
    """(F, taps) windowed band-pass filters; mirrors SincLayer._filter_bank (plain JAX, tiny)."""
    fp = filter_parameters.astype(jnp.float32)
    start = jnp.abs(fp[:, 0:1])                                # (F, 1)
    stop = start + jnp.abs(fp[:, 1:2] - start)                 # (F, 1)
    lin = linear.astype(jnp.float32)[None, :]                  # (1, taps)
    filt = 2.0 * stop * _sinc(lin * stop) - 2.0 * start * _sinc(lin * start)
    return filt * window.astype(jnp.float32)[None, :]          # (F, taps)


def _sinc_conv_kernel(x_ref, halo_ref, w_ref, o_ref):
    # x_ref   : (B_TILE, L_TILE)      current tile of the zero-padded signal
    # halo_ref: (B_TILE, HALO)        the HALO columns immediately to the right of x_ref
    # w_ref   : (F, taps)             filter bank (constant block across the grid)
    # o_ref   : (B_TILE, F, L_TILE)   conv output tile (lane-dense)
    b_tile, l_tile = x_ref.shape
    n_filters, taps = w_ref.shape

    window = jnp.concatenate([x_ref[...], halo_ref[...]], axis=1)   # (B_TILE, L_TILE + HALO)
    # im2col: cols[b, t, l] = window[b, l + t]
    cols = jnp.stack([window[:, t:t + l_tile] for t in range(taps)], axis=1)  # (B_TILE, taps, L_TILE)
    # Batched MXU matmul: (B_TILE, F, taps) x (B_TILE, taps, L_TILE) -> (B_TILE, F, L_TILE)
    w_b = jnp.broadcast_to(w_ref[...][None, :, :], (b_tile, n_filters, taps))
    out = lax.dot_general(
        w_b, cols,
        dimension_numbers=(((2,), (1,)), ((0,), (0,))),
        preferred_element_type=jnp.float32)
    o_ref[...] = out.astype(o_ref.dtype)


def sinc_layer_forward(x, filter_parameters, linear, window, *, b_tile=8, l_tile=512):
    """Pallas SincLayer.forward.  Returns (B, F, L_out) with B = prod(x.shape[:-1])."""
    taps = linear.shape[0]
    n_filters = filter_parameters.shape[0]
    pad = taps // 2
    length = x.shape[-1]

    filters = sinc_filter_bank(filter_parameters, linear, window)   # (F, taps), f32

    xb = x.reshape(-1, length).astype(jnp.float32)                  # x.view(-1, 1, L) -> (B, L)
    n_rows = xb.shape[0]
    l_out = length + 2 * pad - taps + 1                             # PyTorch conv1d output length

    # --- tile geometry ------------------------------------------------------
    halo = _round_up(max(taps - 1, 1), 128)          # lane-aligned right halo, >= taps - 1
    l_tile = min(l_tile, _round_up(l_out, 128))
    l_tile = _round_up(max(l_tile, halo), halo)      # multiple of 128 and of halo
    n_l = pl.cdiv(l_out, l_tile)
    l_out_total = n_l * l_tile                       # lane-dense output width (sliced below)

    b_pad = _round_up(n_rows, b_tile)
    n_b = b_pad // b_tile

    # Zero-padded signal: conv left/right padding + tiling/halo padding.
    # TODO(synk): the padded copy could be avoided by DMA-ing the unpadded input and
    # edge-masking in-kernel; output HBM traffic (F x larger) dominates, so kept simple.
    l_in_total = l_out_total + halo
    x_in = jnp.pad(xb, ((0, b_pad - n_rows), (pad, l_in_total - pad - length)))

    halo_blocks = l_tile // halo                     # halo block index stride along L

    out = pl.pallas_call(
        _sinc_conv_kernel,
        out_shape=jax.ShapeDtypeStruct((b_pad, n_filters, l_out_total), jnp.float32),
        grid=(n_b, n_l),
        in_specs=[
            # main signal tile
            pl.BlockSpec((b_tile, l_tile), lambda i, j: (i, j)),
            # right halo: the `halo` columns starting at element (j + 1) * l_tile
            pl.BlockSpec((b_tile, halo), lambda i, j: (i, (j + 1) * halo_blocks)),
            # filter bank: constant block index -> stays resident, not re-fetched
            pl.BlockSpec((n_filters, taps), lambda i, j: (0, 0)),
        ],
        out_specs=pl.BlockSpec((b_tile, n_filters, l_tile), lambda i, j: (i, 0, j)),
        compiler_params=pltpu.CompilerParams(
            dimension_semantics=("parallel", "parallel")),
    )(x_in, x_in, filters)

    return out[:n_rows, :, :l_out]


# ----------------------------------------------------------------------------
# Pure-JAX reference (mirrors the PyTorch module exactly)
# ----------------------------------------------------------------------------
def reference_forward(x, filter_parameters, linear, window):
    filters = sinc_filter_bank(filter_parameters, linear, window)
    taps = linear.shape[0]
    xb = x.reshape(-1, 1, x.shape[-1]).astype(jnp.float32)
    return lax.conv_general_dilated(
        xb, filters.reshape(filters.shape[0], 1, taps),
        window_strides=(1,), padding=[(taps // 2, taps // 2)],
        dimension_numbers=("NCH", "OIH", "NCH"))


if __name__ == "__main__":
    key = jax.random.PRNGKey(0)
    k1, k2 = jax.random.split(key)

    def make_inputs(k, batch, channels, length, taps, n_filters, samplerate=16000):
        x = jax.random.normal(k, (batch, channels, length), dtype=jnp.float32)
        # Synthetic FrequencyScale: filter_parameters[i] = (sr/start_hz, sr/stop_hz), as in __init__.
        start_hz = jnp.geomspace(20.0, 2000.0, n_filters)
        stop_hz = start_hz * 1.5
        fp = jnp.stack([samplerate / start_hz, samplerate / stop_hz], axis=1).astype(jnp.float32)
        lin = jnp.linspace(-math.pi, math.pi, taps, dtype=jnp.float32)
        n = jnp.arange(taps, dtype=jnp.float32)
        # torch.hamming_window default (periodic=True): 0.54 - 0.46*cos(2*pi*n/taps)
        win = (0.54 - 0.46 * jnp.cos(2.0 * math.pi * n / taps)).astype(jnp.float32)
        return x, fp, lin, win

    def check(out, ref):
        assert out.shape == ref.shape, (out.shape, ref.shape)
        rel = float(jnp.max(jnp.abs(out - ref)) / (jnp.max(jnp.abs(ref)) + 1e-6))
        # Tolerance covers the case where the backend evaluates the f32 MXU contraction
        # with bf16 passes (default matmul precision); exact-f32 evaluation gives ~1e-6.
        assert rel < 1e-2, rel

    # Case 1: small shapes consistent with the module (single grid step).
    x, fp, lin, win = make_inputs(k1, batch=2, channels=4, length=64, taps=16, n_filters=8)
    out = jax.block_until_ready(sinc_layer_forward(x, fp, lin, win))
    check(out, reference_forward(x, fp, lin, win))

    # Case 2: exercises row tiling (2 row-tiles) and length tiling with halo (3 L-tiles).
    x, fp, lin, win = make_inputs(k2, batch=2, channels=8, length=300, taps=32, n_filters=16)
    out = jax.block_until_ready(sinc_layer_forward(x, fp, lin, win, l_tile=128))
    check(out, reference_forward(x, fp, lin, win))

    print("KERNEL_OK")
</pallas_src>

<mosaic_0001>
module attributes {stable_mosaic.version = 11 : i64} {
  func.func @_sinc_conv_kernel(%arg0: i32, %arg1: i32, %arg2: memref<8x128xf32, #tpu.memory_space<vmem>>, %arg3: memref<8x128xf32, #tpu.memory_space<vmem>>, %arg4: memref<8x16xf32, #tpu.memory_space<vmem>>, %arg5: memref<8x8x128xf32, #tpu.memory_space<vmem>>) attributes {dimension_semantics = [#tpu.dimension_semantics<parallel>, #tpu.dimension_semantics<parallel>], iteration_bounds = array<i64: 1, 1>, scalar_prefetch = 0 : i64, scratch_operands = 0 : i64, tpu.core_type = #tpu.core_type<tc>, window_params = [{transform_indices = @transform_0, window_bounds = array<i64: 8, 128>}, {transform_indices = @transform_1, window_bounds = array<i64: 8, 128>}, {pipeline_mode = #tpu.pipeline_mode<synchronous>, transform_indices = @transform_2, window_bounds = array<i64: 8, 16>}, {transform_indices = @transform_3, window_bounds = array<i64: 8, 8, 128>}]} {
    %c0 = arith.constant 0 : index
    %c0_0 = arith.constant 0 : index
    %0 = vector.load %arg2[%c0, %c0_0] : memref<8x128xf32, #tpu.memory_space<vmem>>, vector<8x128xf32>
    %c0_1 = arith.constant 0 : index
    %c0_2 = arith.constant 0 : index
    %1 = vector.load %arg3[%c0_1, %c0_2] : memref<8x128xf32, #tpu.memory_space<vmem>>, vector<8x128xf32>
    %2 = tpu.concatenate %0, %1 in 1 : vector<8x128xf32>, vector<8x128xf32> -> vector<8x256xf32>
    %3 = vector.extract_strided_slice %2 {offsets = [0, 0], sizes = [8, 128], strides = [1, 1]} : vector<8x256xf32> to vector<8x128xf32>
    %4 = vector.extract_strided_slice %2 {offsets = [0, 1], sizes = [8, 128], strides = [1, 1]} : vector<8x256xf32> to vector<8x128xf32>
    %5 = vector.extract_strided_slice %2 {offsets = [0, 2], sizes = [8, 128], strides = [1, 1]} : vector<8x256xf32> to vector<8x128xf32>
    %6 = vector.extract_strided_slice %2 {offsets = [0, 3], sizes = [8, 128], strides = [1, 1]} : vector<8x256xf32> to vector<8x128xf32>
    %7 = vector.extract_strided_slice %2 {offsets = [0, 4], sizes = [8, 128], strides = [1, 1]} : vector<8x256xf32> to vector<8x128xf32>
    %8 = vector.extract_strided_slice %2 {offsets = [0, 5], sizes = [8, 128], strides = [1, 1]} : vector<8x256xf32> to vector<8x128xf32>
    %9 = vector.extract_strided_slice %2 {offsets = [0, 6], sizes = [8, 128], strides = [1, 1]} : vector<8x256xf32> to vector<8x128xf32>
    %10 = vector.extract_strided_slice %2 {offsets = [0, 7], sizes = [8, 128], strides = [1, 1]} : vector<8x256xf32> to vector<8x128xf32>
    %11 = vector.extract_strided_slice %2 {offsets = [0, 8], sizes = [8, 128], strides = [1, 1]} : vector<8x256xf32> to vector<8x128xf32>
    %12 = vector.extract_strided_slice %2 {offsets = [0, 9], sizes = [8, 128], strides = [1, 1]} : vector<8x256xf32> to vector<8x128xf32>
    %13 = vector.extract_strided_slice %2 {offsets = [0, 10], sizes = [8, 128], strides = [1, 1]} : vector<8x256xf32> to vector<8x128xf32>
    %14 = vector.extract_strided_slice %2 {offsets = [0, 11], sizes = [8, 128], strides = [1, 1]} : vector<8x256xf32> to vector<8x128xf32>
    %15 = vector.extract_strided_slice %2 {offsets = [0, 12], sizes = [8, 128], strides = [1, 1]} : vector<8x256xf32> to vector<8x128xf32>
    %16 = vector.extract_strided_slice %2 {offsets = [0, 13], sizes = [8, 128], strides = [1, 1]} : vector<8x256xf32> to vector<8x128xf32>
    %17 = vector.extract_strided_slice %2 {offsets = [0, 14], sizes = [8, 128], strides = [1, 1]} : vector<8x256xf32> to vector<8x128xf32>
    %18 = vector.extract_strided_slice %2 {offsets = [0, 15], sizes = [8, 128], strides = [1, 1]} : vector<8x256xf32> to vector<8x128xf32>
    %19 = vector.shape_cast %3 : vector<8x128xf32> to vector<8x1x128xf32>
    %20 = vector.shape_cast %4 : vector<8x128xf32> to vector<8x1x128xf32>
    %21 = vector.shape_cast %5 : vector<8x128xf32> to vector<8x1x128xf32>
    %22 = vector.shape_cast %6 : vector<8x128xf32> to vector<8x1x128xf32>
    %23 = vector.shape_cast %7 : vector<8x128xf32> to vector<8x1x128xf32>
    %24 = vector.shape_cast %8 : vector<8x128xf32> to vector<8x1x128xf32>
    %25 = vector.shape_cast %9 : vector<8x128xf32> to vector<8x1x128xf32>
    %26 = vector.shape_cast %10 : vector<8x128xf32> to vector<8x1x128xf32>
    %27 = vector.shape_cast %11 : vector<8x128xf32> to vector<8x1x128xf32>
    %28 = vector.shape_cast %12 : vector<8x128xf32> to vector<8x1x128xf32>
    %29 = vector.shape_cast %13 : vector<8x128xf32> to vector<8x1x128xf32>
    %30 = vector.shape_cast %14 : vector<8x128xf32> to vector<8x1x128xf32>
    %31 = vector.shape_cast %15 : vector<8x128xf32> to vector<8x1x128xf32>
    %32 = vector.shape_cast %16 : vector<8x128xf32> to vector<8x1x128xf32>
    %33 = vector.shape_cast %17 : vector<8x128xf32> to vector<8x1x128xf32>
    %34 = vector.shape_cast %18 : vector<8x128xf32> to vector<8x1x128xf32>
    %35 = tpu.concatenate %19, %20, %21, %22, %23, %24, %25, %26, %27, %28, %29, %30, %31, %32, %33, %34 in 1 : vector<8x1x128xf32>, vector<8x1x128xf32>, vector<8x1x128xf32>, vector<8x1x128xf32>, vector<8x1x128xf32>, vector<8x1x128xf32>, vector<8x1x128xf32>, vector<8x1x128xf32>, vector<8x1x128xf32>, vector<8x1x128xf32>, vector<8x1x128xf32>, vector<8x1x128xf32>, vector<8x1x128xf32>, vector<8x1x128xf32>, vector<8x1x128xf32>, vector<8x1x128xf32> -> vector<8x16x128xf32>
    %c0_3 = arith.constant 0 : index
    %c0_4 = arith.constant 0 : index
    %36 = vector.load %arg4[%c0_3, %c0_4] : memref<8x16xf32, #tpu.memory_space<vmem>>, vector<8x16xf32>
    %37 = vector.shape_cast %36 : vector<8x16xf32> to vector<1x8x16xf32>
    %38 = vector.shape_cast %37 : vector<1x8x16xf32> to vector<1x8x16xf32>
    %39 = vector.broadcast %38 : vector<1x8x16xf32> to vector<8x8x16xf32>
    %cst = arith.constant dense<0.000000e+00> : vector<8x8x128xf32>
    %40 = tpu.matmul %39, %35, %cst {dimension_numbers = #tpu.dot_dimension_numbers<[2], [1], [1], [2], [0, 0, 0, 1, 1, 2], [0], [0]>} : vector<8x8x16xf32>, vector<8x16x128xf32>, vector<8x8x128xf32> -> vector<8x8x128xf32>
    %c0_5 = arith.constant 0 : index
    %c0_6 = arith.constant 0 : index
    %c0_7 = arith.constant 0 : index
    %41 = vector.load %arg5[%c0_5, %c0_6, %c0_7] : memref<8x8x128xf32, #tpu.memory_space<vmem>>, vector<8x8x128xf32>
    tpu.vector_store %arg5[%c0_5, %c0_6, %c0_7], %40 {strides = array<i32>} : memref<8x8x128xf32, #tpu.memory_space<vmem>>, vector<8x8x128xf32>,
    return
  }
  func.func @transform_0(%arg0: i32, %arg1: i32) -> (i32, i32) {
    %c0_i32 = arith.constant 0 : i32
    return %arg0, %arg1 : i32, i32
  }
  func.func @transform_1(%arg0: i32, %arg1: i32) -> (i32, i32) {
    %c1_i32 = arith.constant 1 : i32
    %0 = arith.addi %arg1, %c1_i32 : i32
    %c1_i32_0 = arith.constant 1 : i32
    %1 = arith.muli %0, %c1_i32_0 : i32
    %c0_i32 = arith.constant 0 : i32
    return %arg0, %1 : i32, i32
  }
  func.func @transform_2(%arg0: i32, %arg1: i32) -> (i32, i32) {
    %c0_i32 = arith.constant 0 : i32
    %c0_i32_0 = arith.constant 0 : i32
    %c0_i32_1 = arith.constant 0 : i32
    return %c0_i32, %c0_i32_0 : i32, i32
  }
  func.func @transform_3(%arg0: i32, %arg1: i32) -> (i32, i32, i32) {
    %c0_i32 = arith.constant 0 : i32
    %c0_i32_0 = arith.constant 0 : i32
    return %arg0, %c0_i32, %arg1 : i32, i32, i32
  }
}

</mosaic_0001>

<llo_original>
// kernel: tpu_custom_call.1
$region0: #{tpu_custom_call.1}
  #allocation0 [shape = 'u32[]', space=smem, size = 0x4, offset = 0x4, fixed_abs, tag = 'smem constant byte address 0x4 - core index']
  #allocation1 [shape = 'u32[144,128]{1,0:T(1,128)}', space=vmem, size = 0x12000, scoped, tag = 'internal scratch']
  %s0 = inlined_call_operand.hbm [shape: f32[8,256], index: 0, kind: input, shape index: {}]
  %s1 = inlined_call_operand.hbm [shape: f32[8,256], index: 1, kind: input, shape index: {}]
  %s2 = inlined_call_operand.hbm [shape: f32[8,16], index: 2, kind: input, shape index: {}]
  %s3 = inlined_call_operand.hbm [shape: f32[8,8,128], index: 3, kind: output, shape index: {}]
  %s4 = sld [smem:[#allocation0]]
  $region34: #{tpu_custom_call.1} parent=0
    _
  %s6 = ssub.s32 1, %s4
  %s7 = scalar_select 0, %s6, %s4
  $region1: #{tpu_custom_call.1} parent=0
    #allocation2 [shape = 'u8[4096]{0}', space=vmem, size = 0x1000, scoped, tag = 'input window, operand 0, single buffered']
    #allocation3 [shape = 's32[1]{0}', space=sflag, size = 0x4, scoped, tag = 'scoped memory for tpu_custom_call.1']
    #allocation4 [shape = 's32[1]{0}', space=sflag, size = 0x4, scoped, tag = 'scoped memory for tpu_custom_call.1']
    #allocation5 [shape = 'u8[4096]{0}', space=vmem, size = 0x1000, scoped, tag = 'input window, operand 1, single buffered']
    #allocation6 [shape = 's32[1]{0}', space=sflag, size = 0x4, scoped, tag = 'scoped memory for tpu_custom_call.1']
    #allocation7 [shape = 'u8[4096]{0}', space=vmem, size = 0x1000, scoped, tag = 'input window, operand 2, single buffered']
    #allocation8 [shape = 'u8[32768]{0}', space=vmem, size = 0x8000, scoped, tag = 'output window, operand 0, single buffered']
    %8 = vsyncpa [#allocation3], 0
    %9 = vsyncpa [#allocation6], 0
    %10 = vsyncpa [#allocation4], 0
    // Predicated region
    $region2: #{tpu_custom_call.1} parent=1 // pred_check
      _
    $region3: #{tpu_custom_call.1} parent=1 // pred_check_branch
      %12 = sbr.rel (0) target = $region5
    $region4: #{tpu_custom_call.1} parent=1 // pred_region
      %s14 = ssub.s32 128, 128
      %15 = vsyncadd [#allocation3], %s14
      %s17 = sshll.u32 [#allocation2], 4
      %s18 = int_to_ptr.vmem [resolvable:$true] %s17
      %20 = dma.hbm_to_vmem [thread:$0]  %s0, 128, %s18, [#allocation3]
    $region5: #{tpu_custom_call.1} parent=1 // pred_fallthru
      _
    // Predicated region
    $region6: #{tpu_custom_call.1} parent=1 // pred_check
      _
    $region7: #{tpu_custom_call.1} parent=1 // pred_check_branch
      %22 = sbr.rel (0) target = $region9
    $region8: #{tpu_custom_call.1} parent=1 // pred_region
      %s23 = sadd.s32 0, 1
      %s25 = ssub.s32 128, 128
      %26 = vsyncadd [#allocation6], %s25
      %s27 = smul.addr %s23, 128
      %s28 = scalar_lea.hbm %s1, %s27
      %s30 = sshll.u32 [#allocation5], 4
      %s31 = int_to_ptr.vmem [resolvable:$true] %s30
      %33 = dma.hbm_to_vmem [thread:$0]  %s28, 128, %s31, [#allocation6]
    $region9: #{tpu_custom_call.1} parent=1 // pred_fallthru
      _
    // Predicated region
    $region10: #{tpu_custom_call.1} parent=1 // pred_check
      _
    $region11: #{tpu_custom_call.1} parent=1 // pred_check_branch
      %35 = sbr.rel (0) target = $region13
    $region12: #{tpu_custom_call.1} parent=1 // pred_region
      %s37 = ssub.s32 128, 128
      %38 = vsyncadd [#allocation6], %s37
      %s40 = sshll.u32 [#allocation7], 4
      %s41 = int_to_ptr.vmem [resolvable:$true] %s40
      %43 = dma.hbm_to_vmem [thread:$0]  %s2, 128, %s41, [#allocation6]
    $region13: #{tpu_custom_call.1} parent=1 // pred_fallthru
      _
    // Predicated region
    $region14: #{tpu_custom_call.1} parent=1 // pred_check
      _
    $region15: #{tpu_custom_call.1} parent=1 // pred_check_branch
      %45 = sbr.rel (0) target = $region17
    $region16: #{tpu_custom_call.1} parent=1 // pred_region
      %46 = dma.done [#allocation3], 128
    $region17: #{tpu_custom_call.1} parent=1 // pred_fallthru
      _
    // Predicated region
    $region18: #{tpu_custom_call.1} parent=1 // pred_check
      _
    $region19: #{tpu_custom_call.1} parent=1 // pred_check_branch
      %48 = sbr.rel (0) target = $region21
    $region20: #{tpu_custom_call.1} parent=1 // pred_region
      %49 = dma.done [#allocation6], 128
    $region21: #{tpu_custom_call.1} parent=1 // pred_fallthru
      _
    // Predicated region
    $region22: #{tpu_custom_call.1} parent=1 // pred_check
      _
    $region23: #{tpu_custom_call.1} parent=1 // pred_check_branch
      %51 = sbr.rel (0) target = $region25
    $region24: #{tpu_custom_call.1} parent=1 // pred_region
      %52 = dma.done [#allocation6], 128
    $region25: #{tpu_custom_call.1} parent=1 // pred_fallthru
      _
    %s53 = sadd.s32 0, 1
    %v54 = vld [vmem:[#allocation2] sm:$0xff]
    %v55 = vld [vmem:[#allocation5] sm:$0xff]
    %v57 = vcombine.high %v54, %v54
    %v59 = vunpack.c.l.s4 1966171168
    %v60 = vunpack.c.0.s8 %v59
    %v61 = vlaneseq
    %v62 = vshrl.u32 %v61, 7
    %v63 = vsub.s32 %v60, %v62
    %v64 = vrot.slane %v54, %v63
    %v66 = vunpack.c.l.s4 1966171168
    %v67 = vunpack.c.0.s8 %v66
    %v68 = vlaneseq
    %v69 = vshrl.u32 %v68, 7
    %v70 = vsub.s32 %v67, %v69
    %v71 = vrot.slane %v57, %v70
    %v72 = vcombine.high %v64, %v64
    %v73 = vcombine.high %v71, %v71
    %v75 = vunpack.c.l.s4 1966171168
    %v76 = vunpack.c.0.s8 %v75
    %v77 = vlaneseq
    %v78 = vshrl.u32 %v77, 7
    %v79 = vsub.s32 %v76, %v78
    %v80 = vrot.slane %v64, %v79
    %v82 = vunpack.c.l.s4 1966171168
    %v83 = vunpack.c.0.s8 %v82
    %v84 = vlaneseq
    %v85 = vshrl.u32 %v84, 7
    %v86 = vsub.s32 %v83, %v85
    %v87 = vrot.slane %v71, %v86
    %v89 = vunpack.c.l.s4 1966171168
    %v90 = vunpack.c.0.s8 %v89
    %v91 = vlaneseq
    %v92 = vshrl.u32 %v91, 7
    %v93 = vsub.s32 %v90, %v92
    %v94 = vrot.slane %v72, %v93
    %v96 = vunpack.c.l.s4 1966171168
    %v97 = vunpack.c.0.s8 %v96
    %v98 = vlaneseq
    %v99 = vshrl.u32 %v98, 7
    %v100 = vsub.s32 %v97, %v99
    %v101 = vrot.slane %v73, %v100
    %v102 = vcombine.high %v80, %v80
    %v103 = vcombine.high %v87, %v87
    %v104 = vcombine.high %v94, %v94
    %v105 = vcombine.high %v101, %v101
    %v115 = vcombine.low %v54, %v55
    %v116 = vcombine.high %v54, %v55
    %v118 = vunpack.c.l.s4 1966171168
    %v119 = vunpack.c.0.s8 %v118
    %v120 = vlaneseq
    %v121 = vshrl.u32 %v120, 7
    %v122 = vsub.s32 %v119, %v121
    %v123 = vrot.slane %v115, %v122
    %v125 = vunpack.c.l.s4 1966171168
    %v126 = vunpack.c.0.s8 %v125
    %v127 = vlaneseq
    %v128 = vshrl.u32 %v127, 7
    %v129 = vsub.s32 %v126, %v128
    %v130 = vrot.slane %v116, %v129
    %v131 = vcombine.high %v123, %v123
    %v132 = vcombine.high %v130, %v130
    %v134 = vunpack.c.l.s4 1966171168
    %v135 = vunpack.c.0.s8 %v134
    %v136 = vlaneseq
    %v137 = vshrl.u32 %v136, 7
    %v138 = vsub.s32 %v135, %v137
    %v139 = vrot.slane %v123, %v138
    %v141 = vunpack.c.l.s4 1966171168
    %v142 = vunpack.c.0.s8 %v141
    %v143 = vlaneseq
    %v144 = vshrl.u32 %v143, 7
    %v145 = vsub.s32 %v142, %v144
    %v146 = vrot.slane %v130, %v145
    %v148 = vunpack.c.l.s4 1966171168
    %v149 = vunpack.c.0.s8 %v148
    %v150 = vlaneseq
    %v151 = vshrl.u32 %v150, 7
    %v152 = vsub.s32 %v149, %v151
    %v153 = vrot.slane %v131, %v152
    %v155 = vunpack.c.l.s4 1966171168
    %v156 = vunpack.c.0.s8 %v155
    %v157 = vlaneseq
    %v158 = vshrl.u32 %v157, 7
    %v159 = vsub.s32 %v156, %v158
    %v160 = vrot.slane %v132, %v159
    %v161 = vcombine.high %v139, %v139
    %v162 = vcombine.high %v146, %v146
    %v163 = vcombine.high %v153, %v153
    %v164 = vcombine.high %v160, %v160
    %v165 = vlaneseq
    %v166 = vshrl.u32 %v165, 7
    %v167 = vsub.s32 0, %v166
    %v168 = vrot.slane %v139, %v167
    %v169 = vlaneseq
    %v170 = vshrl.u32 %v169, 7
    %v171 = vsub.s32 1, %v170
    %v172 = vrot.slane %v139, %v171
    %v173 = vlaneseq
    %v174 = vshrl.u32 %v173, 7
    %v175 = vsub.s32 0, %v174
    %v176 = vrot.slane %v153, %v175
    %v177 = vlaneseq
    %v178 = vshrl.u32 %v177, 7
    %v179 = vsub.s32 1, %v178
    %v180 = vrot.slane %v153, %v179
    %v181 = vlaneseq
    %v182 = vshrl.u32 %v181, 7
    %v183 = vsub.s32 0, %v182
    %v184 = vrot.slane %v161, %v183
    %v185 = vlaneseq
    %v186 = vshrl.u32 %v185, 7
    %v187 = vsub.s32 1, %v186
    %v188 = vrot.slane %v161, %v187
    %v189 = vlaneseq
    %v190 = vshrl.u32 %v189, 7
    %v191 = vsub.s32 0, %v190
    %v192 = vrot.slane %v163, %v191
    %v193 = vlaneseq
    %v194 = vshrl.u32 %v193, 7
    %v195 = vsub.s32 1, %v194
    %v196 = vrot.slane %v163, %v195
    %v197 = vlaneseq
    %v198 = vshrl.u32 %v197, 7
    %v199 = vsub.s32 0, %v198
    %v200 = vrot.slane %v146, %v199
    %v201 = vlaneseq
    %v202 = vshrl.u32 %v201, 7
    %v203 = vsub.s32 1, %v202
    %v204 = vrot.slane %v146, %v203
    %v205 = vlaneseq
    %v206 = vshrl.u32 %v205, 7
    %v207 = vsub.s32 0, %v206
    %v208 = vrot.slane %v160, %v207
    %v209 = vlaneseq
    %v210 = vshrl.u32 %v209, 7
    %v211 = vsub.s32 1, %v210
    %v212 = vrot.slane %v160, %v211
    %v213 = vlaneseq
    %v214 = vshrl.u32 %v213, 7
    %v215 = vsub.s32 0, %v214
    %v216 = vrot.slane %v162, %v215
    %v217 = vlaneseq
    %v218 = vshrl.u32 %v217, 7
    %v219 = vsub.s32 1, %v218
    %v220 = vrot.slane %v162, %v219
    %v221 = vlaneseq
    %v222 = vshrl.u32 %v221, 7
    %v223 = vsub.s32 0, %v222
    %v224 = vrot.slane %v164, %v223
    %v225 = vlaneseq
    %v226 = vshrl.u32 %v225, 7
    %v227 = vsub.s32 1, %v226
    %v228 = vrot.slane %v164, %v227
    %229 = vrot.lane.b32.xlu0 %v168, 127
    %v230 = vpop.permute.xlu0 %229
    %231 = vrot.lane.b32.xlu0 %v172, 127
    %v232 = vpop.permute.xlu0 %231
    %233 = vrot.lane.b32.xlu0 %v176, 127
    %v234 = vpop.permute.xlu0 %233
    %235 = vrot.lane.b32.xlu0 %v180, 127
    %v236 = vpop.permute.xlu0 %235
    %237 = vrot.lane.b32.xlu0 %v184, 127
    %v238 = vpop.permute.xlu0 %237
    %239 = vrot.lane.b32.xlu0 %v188, 127
    %v240 = vpop.permute.xlu0 %239
    %241 = vrot.lane.b32.xlu0 %v192, 127
    %v242 = vpop.permute.xlu0 %241
    %243 = vrot.lane.b32.xlu0 %v196, 127
    %v244 = vpop.permute.xlu0 %243
    %245 = vrot.lane.b32.xlu0 %v200, 127
    %v246 = vpop.permute.xlu0 %245
    %247 = vrot.lane.b32.xlu0 %v204, 127
    %v248 = vpop.permute.xlu0 %247
    %249 = vrot.lane.b32.xlu0 %v208, 127
    %v250 = vpop.permute.xlu0 %249
    %251 = vrot.lane.b32.xlu0 %v212, 127
    %v252 = vpop.permute.xlu0 %251
    %253 = vrot.lane.b32.xlu0 %v216, 127
    %v254 = vpop.permute.xlu0 %253
    %255 = vrot.lane.b32.xlu0 %v220, 127
    %v256 = vpop.permute.xlu0 %255
    %257 = vrot.lane.b32.xlu0 %v224, 127
    %v258 = vpop.permute.xlu0 %257
    %259 = vrot.lane.b32.xlu0 %v228, 127
    %v260 = vpop.permute.xlu0 %259
    %vm261 = vcmask 1039360
    %v262 = vsel %vm261, %v230, %v232
    %v263 = vsel %vm261, %v234, %v236
    %v264 = vsel %vm261, %v238, %v240
    %v265 = vsel %vm261, %v242, %v244
    %v266 = vsel %vm261, %v246, %v248
    %v267 = vsel %vm261, %v250, %v252
    %v268 = vsel %vm261, %v254, %v256
    %v269 = vsel %vm261, %v258, %v260
    %278 = vrot.lane.b32.xlu0 %v168, 126
    %v279 = vpop.permute.xlu0 %278
    %280 = vrot.lane.b32.xlu0 %v172, 126
    %v281 = vpop.permute.xlu0 %280
    %282 = vrot.lane.b32.xlu0 %v176, 126
    %v283 = vpop.permute.xlu0 %282
    %284 = vrot.lane.b32.xlu0 %v180, 126
    %v285 = vpop.permute.xlu0 %284
    %286 = vrot.lane.b32.xlu0 %v184, 126
    %v287 = vpop.permute.xlu0 %286
    %288 = vrot.lane.b32.xlu0 %v188, 126
    %v289 = vpop.permute.xlu0 %288
    %290 = vrot.lane.b32.xlu0 %v192, 126
    %v291 = vpop.permute.xlu0 %290
    %292 = vrot.lane.b32.xlu0 %v196, 126
    %v293 = vpop.permute.xlu0 %292
    %294 = vrot.lane.b32.xlu0 %v200, 126
    %v295 = vpop.permute.xlu0 %294
    %296 = vrot.lane.b32.xlu0 %v204, 126
    %v297 = vpop.permute.xlu0 %296
    %298 = vrot.lane.b32.xlu0 %v208, 126
    %v299 = vpop.permute.xlu0 %298
    %300 = vrot.lane.b32.xlu0 %v212, 126
    %v301 = vpop.permute.xlu0 %300
    %302 = vrot.lane.b32.xlu0 %v216, 126
    %v303 = vpop.permute.xlu0 %302
    %304 = vrot.lane.b32.xlu0 %v220, 126
    %v305 = vpop.permute.xlu0 %304
    %306 = vrot.lane.b32.xlu0 %v224, 126
    %v307 = vpop.permute.xlu0 %306
    %308 = vrot.lane.b32.xlu0 %v228, 126
    %v309 = vpop.permute.xlu0 %308
    %vm310 = vcmask 1031168
    %v311 = vsel %vm310, %v279, %v281
    %v312 = vsel %vm310, %v283, %v285
    %v313 = vsel %vm310, %v287, %v289
    %v314 = vsel %vm310, %v291, %v293
    %v315 = vsel %vm310, %v295, %v297
    %v316 = vsel %vm310, %v299, %v301
    %v317 = vsel %vm310, %v303, %v305
    %v318 = vsel %vm310, %v307, %v309
    %327 = vrot.lane.b32.xlu0 %v168, 125
    %v328 = vpop.permute.xlu0 %327
    %329 = vrot.lane.b32.xlu0 %v172, 125
    %v330 = vpop.permute.xlu0 %329
    %331 = vrot.lane.b32.xlu0 %v176, 125
    %v332 = vpop.permute.xlu0 %331
    %333 = vrot.lane.b32.xlu0 %v180, 125
    %v334 = vpop.permute.xlu0 %333
    %335 = vrot.lane.b32.xlu0 %v184, 125
    %v336 = vpop.permute.xlu0 %335
    %337 = vrot.lane.b32.xlu0 %v188, 125
    %v338 = vpop.permute.xlu0 %337
    %339 = vrot.lane.b32.xlu0 %v192, 125
    %v340 = vpop.permute.xlu0 %339
    %341 = vrot.lane.b32.xlu0 %v196, 125
    %v342 = vpop.permute.xlu0 %341
    %343 = vrot.lane.b32.xlu0 %v200, 125
    %v344 = vpop.permute.xlu0 %343
    %345 = vrot.lane.b32.xlu0 %v204, 125
    %v346 = vpop.permute.xlu0 %345
    %347 = vrot.lane.b32.xlu0 %v208, 125
    %v348 = vpop.permute.xlu0 %347
    %349 = vrot.lane.b32.xlu0 %v212, 125
    %v350 = vpop.permute.xlu0 %349
    %351 = vrot.lane.b32.xlu0 %v216, 125
    %v352 = vpop.permute.xlu0 %351
    %353 = vrot.lane.b32.xlu0 %v220, 125
    %v354 = vpop.permute.xlu0 %353
    %355 = vrot.lane.b32.xlu0 %v224, 125
    %v356 = vpop.permute.xlu0 %355
    %357 = vrot.lane.b32.xlu0 %v228, 125
    %v358 = vpop.permute.xlu0 %357
    %vm359 = vcmask 1022976
    %v360 = vsel %vm359, %v328, %v330
    %v361 = vsel %vm359, %v332, %v334
    %v362 = vsel %vm359, %v336, %v338
    %v363 = vsel %vm359, %v340, %v342
    %v364 = vsel %vm359, %v344, %v346
    %v365 = vsel %vm359, %v348, %v350
    %v366 = vsel %vm359, %v352, %v354
    %v367 = vsel %vm359, %v356, %v358
    %376 = vrot.lane.b32.xlu0 %v168, 124
    %v377 = vpop.permute.xlu0 %376
    %378 = vrot.lane.b32.xlu0 %v172, 124
    %v379 = vpop.permute.xlu0 %378
    %380 = vrot.lane.b32.xlu0 %v176, 124
    %v381 = vpop.permute.xlu0 %380
    %382 = vrot.lane.b32.xlu0 %v180, 124
    %v383 = vpop.permute.xlu0 %382
    %384 = vrot.lane.b32.xlu0 %v184, 124
    %v385 = vpop.permute.xlu0 %384
    %386 = vrot.lane.b32.xlu0 %v188, 124
    %v387 = vpop.permute.xlu0 %386
    %388 = vrot.lane.b32.xlu0 %v192, 124
    %v389 = vpop.permute.xlu0 %388
    %390 = vrot.lane.b32.xlu0 %v196, 124
    %v391 = vpop.permute.xlu0 %390
    %392 = vrot.lane.b32.xlu0 %v200, 124
    %v393 = vpop.permute.xlu0 %392
    %394 = vrot.lane.b32.xlu0 %v204, 124
    %v395 = vpop.permute.xlu0 %394
    %396 = vrot.lane.b32.xlu0 %v208, 124
    %v397 = vpop.permute.xlu0 %396
    %398 = vrot.lane.b32.xlu0 %v212, 124
    %v399 = vpop.permute.xlu0 %398
    %400 = vrot.lane.b32.xlu0 %v216, 124
    %v401 = vpop.permute.xlu0 %400
    %402 = vrot.lane.b32.xlu0 %v220, 124
    %v403 = vpop.permute.xlu0 %402
    %404 = vrot.lane.b32.xlu0 %v224, 124
    %v405 = vpop.permute.xlu0 %404
    %406 = vrot.lane.b32.xlu0 %v228, 124
    %v407 = vpop.permute.xlu0 %406
    %vm408 = vcmask 1014784
    %v409 = vsel %vm408, %v377, %v379
    %v410 = vsel %vm408, %v381, %v383
    %v411 = vsel %vm408, %v385, %v387
    %v412 = vsel %vm408, %v389, %v391
    %v413 = vsel %vm408, %v393, %v395
    %v414 = vsel %vm408, %v397, %v399
    %v415 = vsel %vm408, %v401, %v403
    %v416 = vsel %vm408, %v405, %v407
    %425 = vrot.lane.b32.xlu0 %v168, 123
    %v426 = vpop.permute.xlu0 %425
    %427 = vrot.lane.b32.xlu0 %v172, 123
    %v428 = vpop.permute.xlu0 %427
    %429 = vrot.lane.b32.xlu0 %v176, 123
    %v430 = vpop.permute.xlu0 %429
    %431 = vrot.lane.b32.xlu0 %v180, 123
    %v432 = vpop.permute.xlu0 %431
    %433 = vrot.lane.b32.xlu0 %v184, 123
    %v434 = vpop.permute.xlu0 %433
    %435 = vrot.lane.b32.xlu0 %v188, 123
    %v436 = vpop.permute.xlu0 %435
    %437 = vrot.lane.b32.xlu0 %v192, 123
    %v438 = vpop.permute.xlu0 %437
    %439 = vrot.lane.b32.xlu0 %v196, 123
    %v440 = vpop.permute.xlu0 %439
    %441 = vrot.lane.b32.xlu0 %v200, 123
    %v442 = vpop.permute.xlu0 %441
    %443 = vrot.lane.b32.xlu0 %v204, 123
    %v444 = vpop.permute.xlu0 %443
    %445 = vrot.lane.b32.xlu0 %v208, 123
    %v446 = vpop.permute.xlu0 %445
    %447 = vrot.lane.b32.xlu0 %v212, 123
    %v448 = vpop.permute.xlu0 %447
    %449 = vrot.lane.b32.xlu0 %v216, 123
    %v450 = vpop.permute.xlu0 %449
    %451 = vrot.lane.b32.xlu0 %v220, 123
    %v452 = vpop.permute.xlu0 %451
    %453 = vrot.lane.b32.xlu0 %v224, 123
    %v454 = vpop.permute.xlu0 %453
    %455 = vrot.lane.b32.xlu0 %v228, 123
    %v456 = vpop.permute.xlu0 %455
    %vm457 = vcmask 1006592
    %v458 = vsel %vm457, %v426, %v428
    %v459 = vsel %vm457, %v430, %v432
    %v460 = vsel %vm457, %v434, %v436
    %v461 = vsel %vm457, %v438, %v440
    %v462 = vsel %vm457, %v442, %v444
    %v463 = vsel %vm457, %v446, %v448
    %v464 = vsel %vm457, %v450, %v452
    %v465 = vsel %vm457, %v454, %v456
    %474 = vrot.lane.b32.xlu0 %v168, 122
    %v475 = vpop.permute.xlu0 %474
    %476 = vrot.lane.b32.xlu0 %v172, 122
    %v477 = vpop.permute.xlu0 %476
    %478 = vrot.lane.b32.xlu0 %v176, 122
    %v479 = vpop.permute.xlu0 %478
    %480 = vrot.lane.b32.xlu0 %v180, 122
    %v481 = vpop.permute.xlu0 %480
    %482 = vrot.lane.b32.xlu0 %v184, 122
    %v483 = vpop.permute.xlu0 %482
    %484 = vrot.lane.b32.xlu0 %v188, 122
    %v485 = vpop.permute.xlu0 %484
    %486 = vrot.lane.b32.xlu0 %v192, 122
    %v487 = vpop.permute.xlu0 %486
    %488 = vrot.lane.b32.xlu0 %v196, 122
    %v489 = vpop.permute.xlu0 %488
    %490 = vrot.lane.b32.xlu0 %v200, 122
    %v491 = vpop.permute.xlu0 %490
    %492 = vrot.lane.b32.xlu0 %v204, 122
    %v493 = vpop.permute.xlu0 %492
    %494 = vrot.lane.b32.xlu0 %v208, 122
    %v495 = vpop.permute.xlu0 %494
    %496 = vrot.lane.b32.xlu0 %v212, 122
    %v497 = vpop.permute.xlu0 %496
    %498 = vrot.lane.b32.xlu0 %v216, 122
    %v499 = vpop.permute.xlu0 %498
    %500 = vrot.lane.b32.xlu0 %v220, 122
    %v501 = vpop.permute.xlu0 %500
    %502 = vrot.lane.b32.xlu0 %v224, 122
    %v503 = vpop.permute.xlu0 %502
    %504 = vrot.lane.b32.xlu0 %v228, 122
    %v505 = vpop.permute.xlu0 %504
    %vm506 = vcmask 998400
    %v507 = vsel %vm506, %v475, %v477
    %v508 = vsel %vm506, %v479, %v481
    %v509 = vsel %vm506, %v483, %v485
    %v510 = vsel %vm506, %v487, %v489
    %v511 = vsel %vm506, %v491, %v493
    %v512 = vsel %vm506, %v495, %v497
    %v513 = vsel %vm506, %v499, %v501
    %v514 = vsel %vm506, %v503, %v505
    %523 = vrot.lane.b32.xlu0 %v168, 121
    %v524 = vpop.permute.xlu0 %523
    %525 = vrot.lane.b32.xlu0 %v172, 121
    %v526 = vpop.permute.xlu0 %525
    %527 = vrot.lane.b32.xlu0 %v176, 121
    %v528 = vpop.permute.xlu0 %527
    %529 = vrot.lane.b32.xlu0 %v180, 121
    %v530 = vpop.permute.xlu0 %529
    %531 = vrot.lane.b32.xlu0 %v184, 121
    %v532 = vpop.permute.xlu0 %531
    %533 = vrot.lane.b32.xlu0 %v188, 121
    %v534 = vpop.permute.xlu0 %533
    %535 = vrot.lane.b32.xlu0 %v192, 121
    %v536 = vpop.permute.xlu0 %535
    %537 = vrot.lane.b32.xlu0 %v196, 121
    %v538 = vpop.permute.xlu0 %537
    %539 = vrot.lane.b32.xlu0 %v200, 121
    %v540 = vpop.permute.xlu0 %539
    %541 = vrot.lane.b32.xlu0 %v204, 121
    %v542 = vpop.permute.xlu0 %541
    %543 = vrot.lane.b32.xlu0 %v208, 121
    %v544 = vpop.permute.xlu0 %543
    %545 = vrot.lane.b32.xlu0 %v212, 121
    %v546 = vpop.permute.xlu0 %545
    %547 = vrot.lane.b32.xlu0 %v216, 121
    %v548 = vpop.permute.xlu0 %547
    %549 = vrot.lane.b32.xlu0 %v220, 121
    %v550 = vpop.permute.xlu0 %549
    %551 = vrot.lane.b32.xlu0 %v224, 121
    %v552 = vpop.permute.xlu0 %551
    %553 = vrot.lane.b32.xlu0 %v228, 121
    %v554 = vpop.permute.xlu0 %553
    %vm555 = vcmask 990208
    %v556 = vsel %vm555, %v524, %v526
    %v557 = vsel %vm555, %v528, %v530
    %v558 = vsel %vm555, %v532, %v534
    %v559 = vsel %vm555, %v536, %v538
    %v560 = vsel %vm555, %v540, %v542
    %v561 = vsel %vm555, %v544, %v546
    %v562 = vsel %vm555, %v548, %v550
    %v563 = vsel %vm555, %v552, %v554
    %572 = vrot.lane.b32.xlu0 %v168, 120
    %v573 = vpop.permute.xlu0 %572
    %574 = vrot.lane.b32.xlu0 %v172, 120
    %v575 = vpop.permute.xlu0 %574
    %576 = vrot.lane.b32.xlu0 %v176, 120
    %v577 = vpop.permute.xlu0 %576
    %578 = vrot.lane.b32.xlu0 %v180, 120
    %v579 = vpop.permute.xlu0 %578
    %580 = vrot.lane.b32.xlu0 %v184, 120
    %v581 = vpop.permute.xlu0 %580
    %582 = vrot.lane.b32.xlu0 %v188, 120
    %v583 = vpop.permute.xlu0 %582
    %584 = vrot.lane.b32.xlu0 %v192, 120
    %v585 = vpop.permute.xlu0 %584
    %586 = vrot.lane.b32.xlu0 %v196, 120
    %v587 = vpop.permute.xlu0 %586
    %588 = vrot.lane.b32.xlu0 %v200, 120
    %v589 = vpop.permute.xlu0 %588
    %590 = vrot.lane.b32.xlu0 %v204, 120
    %v591 = vpop.permute.xlu0 %590
    %592 = vrot.lane.b32.xlu0 %v208, 120
    %v593 = vpop.permute.xlu0 %592
    %594 = vrot.lane.b32.xlu0 %v212, 120
    %v595 = vpop.permute.xlu0 %594
    %596 = vrot.lane.b32.xlu0 %v216, 120
    %v597 = vpop.permute.xlu0 %596
    %598 = vrot.lane.b32.xlu0 %v220, 120
    %v599 = vpop.permute.xlu0 %598
    %600 = vrot.lane.b32.xlu0 %v224, 120
    %v601 = vpop.permute.xlu0 %600
    %602 = vrot.lane.b32.xlu0 %v228, 120
    %v603 = vpop.permute.xlu0 %602
    %vm604 = vcmask 982016
    %v605 = vsel %vm604, %v573, %v575
    %v606 = vsel %vm604, %v577, %v579
    %v607 = vsel %vm604, %v581, %v583
    %v608 = vsel %vm604, %v585, %v587
    %v609 = vsel %vm604, %v589, %v591
    %v610 = vsel %vm604, %v593, %v595
    %v611 = vsel %vm604, %v597, %v599
    %v612 = vsel %vm604, %v601, %v603
    %621 = vrot.lane.b32.xlu0 %v168, 119
    %v622 = vpop.permute.xlu0 %621
    %623 = vrot.lane.b32.xlu0 %v172, 119
    %v624 = vpop.permute.xlu0 %623
    %625 = vrot.lane.b32.xlu0 %v176, 119
    %v626 = vpop.permute.xlu0 %625
    %627 = vrot.lane.b32.xlu0 %v180, 119
    %v628 = vpop.permute.xlu0 %627
    %629 = vrot.lane.b32.xlu0 %v184, 119
    %v630 = vpop.permute.xlu0 %629
    %631 = vrot.lane.b32.xlu0 %v188, 119
    %v632 = vpop.permute.xlu0 %631
    %633 = vrot.lane.b32.xlu0 %v192, 119
    %v634 = vpop.permute.xlu0 %633
    %635 = vrot.lane.b32.xlu0 %v196, 119
    %v636 = vpop.permute.xlu0 %635
    %637 = vrot.lane.b32.xlu0 %v200, 119
    %v638 = vpop.permute.xlu0 %637
    %639 = vrot.lane.b32.xlu0 %v204, 119
    %v640 = vpop.permute.xlu0 %639
    %641 = vrot.lane.b32.xlu0 %v208, 119
    %v642 = vpop.permute.xlu0 %641
    %643 = vrot.lane.b32.xlu0 %v212, 119
    %v644 = vpop.permute.xlu0 %643
    %645 = vrot.lane.b32.xlu0 %v216, 119
    %v646 = vpop.permute.xlu0 %645
    %647 = vrot.lane.b32.xlu0 %v220, 119
    %v648 = vpop.permute.xlu0 %647
    %649 = vrot.lane.b32.xlu0 %v224, 119
    %v650 = vpop.permute.xlu0 %649
    %651 = vrot.lane.b32.xlu0 %v228, 119
    %v652 = vpop.permute.xlu0 %651
    %vm653 = vcmask 973824
    %v654 = vsel %vm653, %v622, %v624
    %v655 = vsel %vm653, %v626, %v628
    %v656 = vsel %vm653, %v630, %v632
    %v657 = vsel %vm653, %v634, %v636
    %v658 = vsel %vm653, %v638, %v640
    %v659 = vsel %vm653, %v642, %v644
    %v660 = vsel %vm653, %v646, %v648
    %v661 = vsel %vm653, %v650, %v652
    %670 = vrot.lane.b32.xlu0 %v168, 118
    %v671 = vpop.permute.xlu0 %670
    %672 = vrot.lane.b32.xlu0 %v172, 118
    %v673 = vpop.permute.xlu0 %672
    %674 = vrot.lane.b32.xlu0 %v176, 118
    %v675 = vpop.permute.xlu0 %674
    %676 = vrot.lane.b32.xlu0 %v180, 118
    %v677 = vpop.permute.xlu0 %676
    %678 = vrot.lane.b32.xlu0 %v184, 118
    %v679 = vpop.permute.xlu0 %678
    %680 = vrot.lane.b32.xlu0 %v188, 118
    %v681 = vpop.permute.xlu0 %680
    %682 = vrot.lane.b32.xlu0 %v192, 118
    %v683 = vpop.permute.xlu0 %682
    %684 = vrot.lane.b32.xlu0 %v196, 118
    %v685 = vpop.permute.xlu0 %684
    %686 = vrot.lane.b32.xlu0 %v200, 118
    %v687 = vpop.permute.xlu0 %686
    %688 = vrot.lane.b32.xlu0 %v204, 118
    %v689 = vpop.permute.xlu0 %688
    %690 = vrot.lane.b32.xlu0 %v208, 118
    %v691 = vpop.permute.xlu0 %690
    %692 = vrot.lane.b32.xlu0 %v212, 118
    %v693 = vpop.permute.xlu0 %692
    %694 = vrot.lane.b32.xlu0 %v216, 118
    %v695 = vpop.permute.xlu0 %694
    %696 = vrot.lane.b32.xlu0 %v220, 118
    %v697 = vpop.permute.xlu0 %696
    %698 = vrot.lane.b32.xlu0 %v224, 118
    %v699 = vpop.permute.xlu0 %698
    %700 = vrot.lane.b32.xlu0 %v228, 118
    %v701 = vpop.permute.xlu0 %700
    %vm702 = vcmask 965632
    %v703 = vsel %vm702, %v671, %v673
    %v704 = vsel %vm702, %v675, %v677
    %v705 = vsel %vm702, %v679, %v681
    %v706 = vsel %vm702, %v683, %v685
    %v707 = vsel %vm702, %v687, %v689
    %v708 = vsel %vm702, %v691, %v693
    %v709 = vsel %vm702, %v695, %v697
    %v710 = vsel %vm702, %v699, %v701
    %719 = vrot.lane.b32.xlu0 %v168, 117
    %v720 = vpop.permute.xlu0 %719
    %721 = vrot.lane.b32.xlu0 %v172, 117
    %v722 = vpop.permute.xlu0 %721
    %723 = vrot.lane.b32.xlu0 %v176, 117
    %v724 = vpop.permute.xlu0 %723
    %725 = vrot.lane.b32.xlu0 %v180, 117
    %v726 = vpop.permute.xlu0 %725
    %727 = vrot.lane.b32.xlu0 %v184, 117
    %v728 = vpop.permute.xlu0 %727
    %729 = vrot.lane.b32.xlu0 %v188, 117
    %v730 = vpop.permute.xlu0 %729
    %731 = vrot.lane.b32.xlu0 %v192, 117
    %v732 = vpop.permute.xlu0 %731
    %733 = vrot.lane.b32.xlu0 %v196, 117
    %v734 = vpop.permute.xlu0 %733
    %735 = vrot.lane.b32.xlu0 %v200, 117
    %v736 = vpop.permute.xlu0 %735
    %737 = vrot.lane.b32.xlu0 %v204, 117
    %v738 = vpop.permute.xlu0 %737
    %739 = vrot.lane.b32.xlu0 %v208, 117
    %v740 = vpop.permute.xlu0 %739
    %741 = vrot.lane.b32.xlu0 %v212, 117
    %v742 = vpop.permute.xlu0 %741
    %743 = vrot.lane.b32.xlu0 %v216, 117
    %v744 = vpop.permute.xlu0 %743
    %745 = vrot.lane.b32.xlu0 %v220, 117
    %v746 = vpop.permute.xlu0 %745
    %747 = vrot.lane.b32.xlu0 %v224, 117
    %v748 = vpop.permute.xlu0 %747
    %749 = vrot.lane.b32.xlu0 %v228, 117
    %v750 = vpop.permute.xlu0 %749
    %vm751 = vcmask 957440
    %v752 = vsel %vm751, %v720, %v722
    %v753 = vsel %vm751, %v724, %v726
    %v754 = vsel %vm751, %v728, %v730
    %v755 = vsel %vm751, %v732, %v734
    %v756 = vsel %vm751, %v736, %v738
    %v757 = vsel %vm751, %v740, %v742
    %v758 = vsel %vm751, %v744, %v746
    %v759 = vsel %vm751, %v748, %v750
    %768 = vrot.lane.b32.xlu0 %v168, 116
    %v769 = vpop.permute.xlu0 %768
    %770 = vrot.lane.b32.xlu0 %v172, 116
    %v771 = vpop.permute.xlu0 %770
    %772 = vrot.lane.b32.xlu0 %v176, 116
    %v773 = vpop.permute.xlu0 %772
    %774 = vrot.lane.b32.xlu0 %v180, 116
    %v775 = vpop.permute.xlu0 %774
    %776 = vrot.lane.b32.xlu0 %v184, 116
    %v777 = vpop.permute.xlu0 %776
    %778 = vrot.lane.b32.xlu0 %v188, 116
    %v779 = vpop.permute.xlu0 %778
    %780 = vrot.lane.b32.xlu0 %v192, 116
    %v781 = vpop.permute.xlu0 %780
    %782 = vrot.lane.b32.xlu0 %v196, 116
    %v783 = vpop.permute.xlu0 %782
    %784 = vrot.lane.b32.xlu0 %v200, 116
    %v785 = vpop.permute.xlu0 %784
    %786 = vrot.lane.b32.xlu0 %v204, 116
    %v787 = vpop.permute.xlu0 %786
    %788 = vrot.lane.b32.xlu0 %v208, 116
    %v789 = vpop.permute.xlu0 %788
    %790 = vrot.lane.b32.xlu0 %v212, 116
    %v791 = vpop.permute.xlu0 %790
    %792 = vrot.lane.b32.xlu0 %v216, 116
    %v793 = vpop.permute.xlu0 %792
    %794 = vrot.lane.b32.xlu0 %v220, 116
    %v795 = vpop.permute.xlu0 %794
    %796 = vrot.lane.b32.xlu0 %v224, 116
    %v797 = vpop.permute.xlu0 %796
    %798 = vrot.lane.b32.xlu0 %v228, 116
    %v799 = vpop.permute.xlu0 %798
    %vm800 = vcmask 949248
    %v801 = vsel %vm800, %v769, %v771
    %v802 = vsel %vm800, %v773, %v775
    %v803 = vsel %vm800, %v777, %v779
    %v804 = vsel %vm800, %v781, %v783
    %v805 = vsel %vm800, %v785, %v787
    %v806 = vsel %vm800, %v789, %v791
    %v807 = vsel %vm800, %v793, %v795
    %v808 = vsel %vm800, %v797, %v799
    %817 = vrot.lane.b32.xlu0 %v168, 115
    %v818 = vpop.permute.xlu0 %817
    %819 = vrot.lane.b32.xlu0 %v172, 115
    %v820 = vpop.permute.xlu0 %819
    %821 = vrot.lane.b32.xlu0 %v176, 115
    %v822 = vpop.permute.xlu0 %821
    %823 = vrot.lane.b32.xlu0 %v180, 115
    %v824 = vpop.permute.xlu0 %823
    %825 = vrot.lane.b32.xlu0 %v184, 115
    %v826 = vpop.permute.xlu0 %825
    %827 = vrot.lane.b32.xlu0 %v188, 115
    %v828 = vpop.permute.xlu0 %827
    %829 = vrot.lane.b32.xlu0 %v192, 115
    %v830 = vpop.permute.xlu0 %829
    %831 = vrot.lane.b32.xlu0 %v196, 115
    %v832 = vpop.permute.xlu0 %831
    %833 = vrot.lane.b32.xlu0 %v200, 115
    %v834 = vpop.permute.xlu0 %833
    %835 = vrot.lane.b32.xlu0 %v204, 115
    %v836 = vpop.permute.xlu0 %835
    %837 = vrot.lane.b32.xlu0 %v208, 115
    %v838 = vpop.permute.xlu0 %837
    %839 = vrot.lane.b32.xlu0 %v212, 115
    %v840 = vpop.permute.xlu0 %839
    %841 = vrot.lane.b32.xlu0 %v216, 115
    %v842 = vpop.permute.xlu0 %841
    %843 = vrot.lane.b32.xlu0 %v220, 115
    %v844 = vpop.permute.xlu0 %843
    %845 = vrot.lane.b32.xlu0 %v224, 115
    %v846 = vpop.permute.xlu0 %845
    %847 = vrot.lane.b32.xlu0 %v228, 115
    %v848 = vpop.permute.xlu0 %847
    %vm849 = vcmask 941056
    %v850 = vsel %vm849, %v818, %v820
    %v851 = vsel %vm849, %v822, %v824
    %v852 = vsel %vm849, %v826, %v828
    %v853 = vsel %vm849, %v830, %v832
    %v854 = vsel %vm849, %v834, %v836
    %v855 = vsel %vm849, %v838, %v840
    %v856 = vsel %vm849, %v842, %v844
    %v857 = vsel %vm849, %v846, %v848
    %866 = vrot.lane.b32.xlu0 %v168, 114
    %v867 = vpop.permute.xlu0 %866
    %868 = vrot.lane.b32.xlu0 %v172, 114
    %v869 = vpop.permute.xlu0 %868
    %870 = vrot.lane.b32.xlu0 %v176, 114
    %v871 = vpop.permute.xlu0 %870
    %872 = vrot.lane.b32.xlu0 %v180, 114
    %v873 = vpop.permute.xlu0 %872
    %874 = vrot.lane.b32.xlu0 %v184, 114
    %v875 = vpop.permute.xlu0 %874
    %876 = vrot.lane.b32.xlu0 %v188, 114
    %v877 = vpop.permute.xlu0 %876
    %878 = vrot.lane.b32.xlu0 %v192, 114
    %v879 = vpop.permute.xlu0 %878
    %880 = vrot.lane.b32.xlu0 %v196, 114
    %v881 = vpop.permute.xlu0 %880
    %882 = vrot.lane.b32.xlu0 %v200, 114
    %v883 = vpop.permute.xlu0 %882
    %884 = vrot.lane.b32.xlu0 %v204, 114
    %v885 = vpop.permute.xlu0 %884
    %886 = vrot.lane.b32.xlu0 %v208, 114
    %v887 = vpop.permute.xlu0 %886
    %888 = vrot.lane.b32.xlu0 %v212, 114
    %v889 = vpop.permute.xlu0 %888
    %890 = vrot.lane.b32.xlu0 %v216, 114
    %v891 = vpop.permute.xlu0 %890
    %892 = vrot.lane.b32.xlu0 %v220, 114
    %v893 = vpop.permute.xlu0 %892
    %894 = vrot.lane.b32.xlu0 %v224, 114
    %v895 = vpop.permute.xlu0 %894
    %896 = vrot.lane.b32.xlu0 %v228, 114
    %v897 = vpop.permute.xlu0 %896
    %vm898 = vcmask 932864
    %v899 = vsel %vm898, %v867, %v869
    %v900 = vsel %vm898, %v871, %v873
    %v901 = vsel %vm898, %v875, %v877
    %v902 = vsel %vm898, %v879, %v881
    %v903 = vsel %vm898, %v883, %v885
    %v904 = vsel %vm898, %v887, %v889
    %v905 = vsel %vm898, %v891, %v893
    %v906 = vsel %vm898, %v895, %v897
    %915 = vrot.lane.b32.xlu0 %v168, 113
    %v916 = vpop.permute.xlu0 %915
    %917 = vrot.lane.b32.xlu0 %v172, 113
    %v918 = vpop.permute.xlu0 %917
    %919 = vrot.lane.b32.xlu0 %v176, 113
    %v920 = vpop.permute.xlu0 %919
    %921 = vrot.lane.b32.xlu0 %v180, 113
    %v922 = vpop.permute.xlu0 %921
    %923 = vrot.lane.b32.xlu0 %v184, 113
    %v924 = vpop.permute.xlu0 %923
    %925 = vrot.lane.b32.xlu0 %v188, 113
    %v926 = vpop.permute.xlu0 %925
    %927 = vrot.lane.b32.xlu0 %v192, 113
    %v928 = vpop.permute.xlu0 %927
    %929 = vrot.lane.b32.xlu0 %v196, 113
    %v930 = vpop.permute.xlu0 %929
    %931 = vrot.lane.b32.xlu0 %v200, 113
    %v932 = vpop.permute.xlu0 %931
    %933 = vrot.lane.b32.xlu0 %v204, 113
    %v934 = vpop.permute.xlu0 %933
    %935 = vrot.lane.b32.xlu0 %v208, 113
    %v936 = vpop.permute.xlu0 %935
    %937 = vrot.lane.b32.xlu0 %v212, 113
    %v938 = vpop.permute.xlu0 %937
    %939 = vrot.lane.b32.xlu0 %v216, 113
    %v940 = vpop.permute.xlu0 %939
    %941 = vrot.lane.b32.xlu0 %v220, 113
    %v942 = vpop.permute.xlu0 %941
    %943 = vrot.lane.b32.xlu0 %v224, 113
    %v944 = vpop.permute.xlu0 %943
    %945 = vrot.lane.b32.xlu0 %v228, 113
    %v946 = vpop.permute.xlu0 %945
    %vm947 = vcmask 924672
    %v948 = vsel %vm947, %v916, %v918
    %v949 = vsel %vm947, %v920, %v922
    %v950 = vsel %vm947, %v924, %v926
    %v951 = vsel %vm947, %v928, %v930
    %v952 = vsel %vm947, %v932, %v934
    %v953 = vsel %vm947, %v936, %v938
    %v954 = vsel %vm947, %v940, %v942
    %v955 = vsel %vm947, %v944, %v946
    %vm964 = vcmask 1040384
    %v965 = vsel %vm964, %v80, %v262
    %v966 = vsel %vm964, %v94, %v263
    %v967 = vsel %vm964, %v102, %v264
    %v968 = vsel %vm964, %v104, %v265
    %v969 = vsel %vm964, %v87, %v266
    %v970 = vsel %vm964, %v101, %v267
    %v971 = vsel %vm964, %v103, %v268
    %v972 = vsel %vm964, %v105, %v269
    %vm973 = vcmask 1041408
    %v974 = vsel %vm973, %v965, %v311
    %v975 = vsel %vm973, %v966, %v312
    %v976 = vsel %vm973, %v967, %v313
    %v977 = vsel %vm973, %v968, %v314
    %v978 = vsel %vm973, %v969, %v315
    %v979 = vsel %vm973, %v970, %v316
    %v980 = vsel %vm973, %v971, %v317
    %v981 = vsel %vm973, %v972, %v318
    %vm982 = vcmask 1042432
    %v983 = vsel %vm982, %v974, %v360
    %v984 = vsel %vm982, %v975, %v361
    %v985 = vsel %vm982, %v976, %v362
    %v986 = vsel %vm982, %v977, %v363
    %v987 = vsel %vm982, %v978, %v364
    %v988 = vsel %vm982, %v979, %v365
    %v989 = vsel %vm982, %v980, %v366
    %v990 = vsel %vm982, %v981, %v367
    %vm991 = vcmask 1043456
    %v992 = vsel %vm991, %v983, %v409
    %v993 = vsel %vm991, %v984, %v410
    %v994 = vsel %vm991, %v985, %v411
    %v995 = vsel %vm991, %v986, %v412
    %v996 = vsel %vm991, %v987, %v413
    %v997 = vsel %vm991, %v988, %v414
    %v998 = vsel %vm991, %v989, %v415
    %v999 = vsel %vm991, %v990, %v416
    %vm1000 = vcmask 1044480
    %v1001 = vsel %vm1000, %v992, %v458
    %v1002 = vsel %vm1000, %v993, %v459
    %v1003 = vsel %vm1000, %v994, %v460
    %v1004 = vsel %vm1000, %v995, %v461
    %v1005 = vsel %vm1000, %v996, %v462
    %v1006 = vsel %vm1000, %v997, %v463
    %v1007 = vsel %vm1000, %v998, %v464
    %v1008 = vsel %vm1000, %v999, %v465
    %vm1009 = vcmask 1045504
    %v1010 = vsel %vm1009, %v1001, %v507
    %v1011 = vsel %vm1009, %v1002, %v508
    %v1012 = vsel %vm1009, %v1003, %v509
    %v1013 = vsel %vm1009, %v1004, %v510
    %v1014 = vsel %vm1009, %v1005, %v511
    %v1015 = vsel %vm1009, %v1006, %v512
    %v1016 = vsel %vm1009, %v1007, %v513
    %v1017 = vsel %vm1009, %v1008, %v514
    %vm1018 = vcmask 1046528
    %v1019 = vsel %vm1018, %v1010, %v556
    %v1020 = vsel %vm1018, %v1011, %v557
    %v1021 = vsel %vm1018, %v1012, %v558
    %v1022 = vsel %vm1018, %v1013, %v559
    %v1023 = vsel %vm1018, %v1014, %v560
    %v1024 = vsel %vm1018, %v1015, %v561
    %v1025 = vsel %vm1018, %v1016, %v562
    %v1026 = vsel %vm1018, %v1017, %v563
    %v1027 = vsel %vm964, %v605, %v654
    %v1028 = vsel %vm964, %v606, %v655
    %v1029 = vsel %vm964, %v607, %v656
    %v1030 = vsel %vm964, %v608, %v657
    %v1031 = vsel %vm964, %v609, %v658
    %v1032 = vsel %vm964, %v610, %v659
    %v1033 = vsel %vm964, %v611, %v660
    %v1034 = vsel %vm964, %v612, %v661
    %v1035 = vsel %vm973, %v1027, %v703
    %v1036 = vsel %vm973, %v1028, %v704
    %v1037 = vsel %vm973, %v1029, %v705
    %v1038 = vsel %vm973, %v1030, %v706
    %v1039 = vsel %vm973, %v1031, %v707
    %v1040 = vsel %vm973, %v1032, %v708
    %v1041 = vsel %vm973, %v1033, %v709
    %v1042 = vsel %vm973, %v1034, %v710
    %v1043 = vsel %vm982, %v1035, %v752
    %v1044 = vsel %vm982, %v1036, %v753
    %v1045 = vsel %vm982, %v1037, %v754
    %v1046 = vsel %vm982, %v1038, %v755
    %v1047 = vsel %vm982, %v1039, %v756
    %v1048 = vsel %vm982, %v1040, %v757
    %v1049 = vsel %vm982, %v1041, %v758
    %v1050 = vsel %vm982, %v1042, %v759
    %v1051 = vsel %vm991, %v1043, %v801
    %v1052 = vsel %vm991, %v1044, %v802
    %v1053 = vsel %vm991, %v1045, %v803
    %v1054 = vsel %vm991, %v1046, %v804
    %v1055 = vsel %vm991, %v1047, %v805
    %v1056 = vsel %vm991, %v1048, %v806
    %v1057 = vsel %vm991, %v1049, %v807
    %v1058 = vsel %vm991, %v1050, %v808
    %v1059 = vsel %vm1000, %v1051, %v850
    %v1060 = vsel %vm1000, %v1052, %v851
    %v1061 = vsel %vm1000, %v1053, %v852
    %v1062 = vsel %vm1000, %v1054, %v853
    %v1063 = vsel %vm1000, %v1055, %v854
    %v1064 = vsel %vm1000, %v1056, %v855
    %v1065 = vsel %vm1000, %v1057, %v856
    %v1066 = vsel %vm1000, %v1058, %v857
    %v1067 = vsel %vm1009, %v1059, %v899
    %v1068 = vsel %vm1009, %v1060, %v900
    %v1069 = vsel %vm1009, %v1061, %v901
    %v1070 = vsel %vm1009, %v1062, %v902
    %v1071 = vsel %vm1009, %v1063, %v903
    %v1072 = vsel %vm1009, %v1064, %v904
    %v1073 = vsel %vm1009, %v1065, %v905
    %v1074 = vsel %vm1009, %v1066, %v906
    %v1075 = vsel %vm1018, %v1067, %v948
    %v1076 = vsel %vm1018, %v1068, %v949
    %v1077 = vsel %vm1018, %v1069, %v950
    %v1078 = vsel %vm1018, %v1070, %v951
    %v1079 = vsel %vm1018, %v1071, %v952
    %v1080 = vsel %vm1018, %v1072, %v953
    %v1081 = vsel %vm1018, %v1073, %v954
    %v1082 = vsel %vm1018, %v1074, %v955
    %v1083 = vld [vmem:[#allocation7] sm:$0xff]
    %vm1084 = vcmask 130048
    %v1086 = vsel %vm1084, %v1083, 0
    %1088 = vmatprep.subr.mxu0 0.0
    %1089 = vmatpush1.msra.mxu0 %v1019
    %1090 = vmatprep.subr.mxu0 0.0
    %1091 = vmatpush1.msra.mxu0 %v1075
    %1092 = vmatprep.subr.mxu0 0.0
    %1093 = vmatpush1.msra.mxu0 0.0
    %1094 = vmatprep.subr.mxu0 0.0
    %1095 = vmatpush1.msra.mxu0 0.0
    %1096 = vmatprep.subr.mxu0 0.0
    %1097 = vmatpush1.msra.mxu0 0.0
    %1098 = vmatprep.subr.mxu0 0.0
    %1099 = vmatpush1.msra.mxu0 0.0
    %1100 = vmatprep.subr.mxu0 0.0
    %1101 = vmatpush1.msra.mxu0 0.0
    %1102 = vmatprep.subr.mxu0 0.0
    %1103 = vmatpush1.msra.mxu0 0.0
    %1104 = vmatprep.subr.mxu0 0.0
    %1105 = vmatpush1.msra.mxu0 0.0
    %1106 = vmatprep.subr.mxu0 0.0
    %1107 = vmatpush1.msra.mxu0 0.0
    %1108 = vmatprep.subr.mxu0 0.0
    %1109 = vmatpush1.msra.mxu0 0.0
    %1110 = vmatprep.subr.mxu0 0.0
    %1111 = vmatpush1.msra.mxu0 0.0
    %1112 = vmatprep.subr.mxu0 0.0
    %1113 = vmatpush1.msra.mxu0 0.0
    %1114 = vmatprep.subr.mxu0 0.0
    %1115 = vmatpush1.msra.mxu0 0.0
    %1116 = vmatprep.subr.mxu0 0.0
    %1117 = vmatpush1.msra.mxu0 0.0
    %1118 = vmatprep.subr.mxu0 0.0
    %1119 = vmatpush1.msra.mxu0 0.0
    %1120 = vmatprep.subr.mxu0 0.0
    %1121 = vmatpush1.msra.mxu0 0.0
    %1122 = vmatprep.subr.mxu0 0.0
    %1123 = vmatpush1.msra.mxu0 0.0
    %1124 = vmatprep.subr.mxu0 0.0
    %1125 = vmatpush1.msra.mxu0 0.0
    %1126 = vmatprep.subr.mxu0 0.0
    %1127 = vmatpush1.msra.mxu0 0.0
    %1128 = vmatprep.subr.mxu0 0.0
    %1129 = vmatpush1.msra.mxu0 0.0
    %1130 = vmatprep.subr.mxu0 0.0
    %1131 = vmatpush1.msra.mxu0 0.0
    %1132 = vmatprep.subr.mxu0 0.0
    %1133 = vmatpush1.msra.mxu0 0.0
    %1134 = vmatprep.subr.mxu0 0.0
    %1135 = vmatpush1.msra.mxu0 0.0
    %1136 = vmatprep.subr.mxu0 0.0
    %1137 = vmatpush1.msra.mxu0 0.0
    %1138 = vmatprep.subr.mxu0 0.0
    %1139 = vmatpush1.msra.mxu0 0.0
    %1140 = vmatprep.subr.mxu0 0.0
    %1141 = vmatpush1.msra.mxu0 0.0
    %1142 = vmatprep.subr.mxu0 0.0
    %1143 = vmatpush1.msra.mxu0 0.0
    %1144 = vmatprep.subr.mxu0 0.0
    %1145 = vmatpush1.msra.mxu0 0.0
    %1146 = vmatprep.subr.mxu0 0.0
    %1147 = vmatpush1.msra.mxu0 0.0
    %1148 = vmatprep.subr.mxu0 0.0
    %1149 = vmatpush1.msra.mxu0 0.0
    %1150 = vmatprep.subr.mxu0 0.0
    %1151 = vmatpush1.msra.mxu0 0.0
    %1152 = vmatprep.mubr.f32.mxu0 0.0
    %1153 = vmatmul.mubr.f32.gmra.mrb[0].mxu0 %v1086
    %v1154 = vpop.f32.mrb[0].mxu0
    %v1155 = vadd.f32 0.0, %v1154
    %v1156 = vpop.f32.mrb[0].mxu0
    %1157 = vdwg.mxu0
    %1158 = vmatprep.subr.mxu0 0.0
    %1159 = vmatpush1.msra.mxu0 %v1020
    %1160 = vmatprep.subr.mxu0 0.0
    %1161 = vmatpush1.msra.mxu0 %v1076
    %1162 = vmatprep.subr.mxu0 0.0
    %1163 = vmatpush1.msra.mxu0 0.0
    %1164 = vmatprep.subr.mxu0 0.0
    %1165 = vmatpush1.msra.mxu0 0.0
    %1166 = vmatprep.subr.mxu0 0.0
    %1167 = vmatpush1.msra.mxu0 0.0
    %1168 = vmatprep.subr.mxu0 0.0
    %1169 = vmatpush1.msra.mxu0 0.0
    %1170 = vmatprep.subr.mxu0 0.0
    %1171 = vmatpush1.msra.mxu0 0.0
    %1172 = vmatprep.subr.mxu0 0.0
    %1173 = vmatpush1.msra.mxu0 0.0
    %1174 = vmatprep.subr.mxu0 0.0
    %1175 = vmatpush1.msra.mxu0 0.0
    %1176 = vmatprep.subr.mxu0 0.0
    %1177 = vmatpush1.msra.mxu0 0.0
    %1178 = vmatprep.subr.mxu0 0.0
    %1179 = vmatpush1.msra.mxu0 0.0
    %1180 = vmatprep.subr.mxu0 0.0
    %1181 = vmatpush1.msra.mxu0 0.0
    %1182 = vmatprep.subr.mxu0 0.0
    %1183 = vmatpush1.msra.mxu0 0.0
    %1184 = vmatprep.subr.mxu0 0.0
    %1185 = vmatpush1.msra.mxu0 0.0
    %1186 = vmatprep.subr.mxu0 0.0
    %1187 = vmatpush1.msra.mxu0 0.0
    %1188 = vmatprep.subr.mxu0 0.0
    %1189 = vmatpush1.msra.mxu0 0.0
    %1190 = vmatprep.subr.mxu0 0.0
    %1191 = vmatpush1.msra.mxu0 0.0
    %1192 = vmatprep.subr.mxu0 0.0
    %1193 = vmatpush1.msra.mxu0 0.0
    %1194 = vmatprep.subr.mxu0 0.0
    %1195 = vmatpush1.msra.mxu0 0.0
    %1196 = vmatprep.subr.mxu0 0.0
    %1197 = vmatpush1.msra.mxu0 0.0
    %1198 = vmatprep.subr.mxu0 0.0
    %1199 = vmatpush1.msra.mxu0 0.0
    %1200 = vmatprep.subr.mxu0 0.0
    %1201 = vmatpush1.msra.mxu0 0.0
    %1202 = vmatprep.subr.mxu0 0.0
    %1203 = vmatpush1.msra.mxu0 0.0
    %1204 = vmatprep.subr.mxu0 0.0
    %1205 = vmatpush1.msra.mxu0 0.0
    %1206 = vmatprep.subr.mxu0 0.0
    %1207 = vmatpush1.msra.mxu0 0.0
    %1208 = vmatprep.subr.mxu0 0.0
    %1209 = vmatpush1.msra.mxu0 0.0
    %1210 = vmatprep.subr.mxu0 0.0
    %1211 = vmatpush1.msra.mxu0 0.0
    %1212 = vmatprep.subr.mxu0 0.0
    %1213 = vmatpush1.msra.mxu0 0.0
    %1214 = vmatprep.subr.mxu0 0.0
    %1215 = vmatpush1.msra.mxu0 0.0
    %1216 = vmatprep.subr.mxu0 0.0
    %1217 = vmatpush1.msra.mxu0 0.0
    %1218 = vmatprep.subr.mxu0 0.0
    %1219 = vmatpush1.msra.mxu0 0.0
    %1220 = vmatprep.subr.mxu0 0.0
    %1221 = vmatpush1.msra.mxu0 0.0
    %1222 = vmatprep.mubr.f32.mxu0 0.0
    %1223 = vmatmul.mubr.f32.gmra.mrb[0].mxu0 %v1086
    %v1224 = vpop.f32.mrb[0].mxu0
    %v1225 = vadd.f32 0.0, %v1224
    %v1226 = vpop.f32.mrb[0].mxu0
    %1227 = vdwg.mxu0
    %1228 = vmatprep.subr.mxu0 0.0
    %1229 = vmatpush1.msra.mxu0 %v1021
    %1230 = vmatprep.subr.mxu0 0.0
    %1231 = vmatpush1.msra.mxu0 %v1077
    %1232 = vmatprep.subr.mxu0 0.0
    %1233 = vmatpush1.msra.mxu0 0.0
    %1234 = vmatprep.subr.mxu0 0.0
    %1235 = vmatpush1.msra.mxu0 0.0
    %1236 = vmatprep.subr.mxu0 0.0
    %1237 = vmatpush1.msra.mxu0 0.0
    %1238 = vmatprep.subr.mxu0 0.0
    %1239 = vmatpush1.msra.mxu0 0.0
    %1240 = vmatprep.subr.mxu0 0.0
    %1241 = vmatpush1.msra.mxu0 0.0
    %1242 = vmatprep.subr.mxu0 0.0
    %1243 = vmatpush1.msra.mxu0 0.0
    %1244 = vmatprep.subr.mxu0 0.0
    %1245 = vmatpush1.msra.mxu0 0.0
    %1246 = vmatprep.subr.mxu0 0.0
    %1247 = vmatpush1.msra.mxu0 0.0
    %1248 = vmatprep.subr.mxu0 0.0
    %1249 = vmatpush1.msra.mxu0 0.0
    %1250 = vmatprep.subr.mxu0 0.0
    %1251 = vmatpush1.msra.mxu0 0.0
    %1252 = vmatprep.subr.mxu0 0.0
    %1253 = vmatpush1.msra.mxu0 0.0
    %1254 = vmatprep.subr.mxu0 0.0
    %1255 = vmatpush1.msra.mxu0 0.0
    %1256 = vmatprep.subr.mxu0 0.0
    %1257 = vmatpush1.msra.mxu0 0.0
    %1258 = vmatprep.subr.mxu0 0.0
    %1259 = vmatpush1.msra.mxu0 0.0
    %1260 = vmatprep.subr.mxu0 0.0
    %1261 = vmatpush1.msra.mxu0 0.0
    %1262 = vmatprep.subr.mxu0 0.0
    %1263 = vmatpush1.msra.mxu0 0.0
    %1264 = vmatprep.subr.mxu0 0.0
    %1265 = vmatpush1.msra.mxu0 0.0
    %1266 = vmatprep.subr.mxu0 0.0
    %1267 = vmatpush1.msra.mxu0 0.0
    %1268 = vmatprep.subr.mxu0 0.0
    %1269 = vmatpush1.msra.mxu0 0.0
    %1270 = vmatprep.subr.mxu0 0.0
    %1271 = vmatpush1.msra.mxu0 0.0
    %1272 = vmatprep.subr.mxu0 0.0
    %1273 = vmatpush1.msra.mxu0 0.0
    %1274 = vmatprep.subr.mxu0 0.0
    %1275 = vmatpush1.msra.mxu0 0.0
    %1276 = vmatprep.subr.mxu0 0.0
    %1277 = vmatpush1.msra.mxu0 0.0
    %1278 = vmatprep.subr.mxu0 0.0
    %1279 = vmatpush1.msra.mxu0 0.0
    %1280 = vmatprep.subr.mxu0 0.0
    %1281 = vmatpush1.msra.mxu0 0.0
    %1282 = vmatprep.subr.mxu0 0.0
    %1283 = vmatpush1.msra.mxu0 0.0
    %1284 = vmatprep.subr.mxu0 0.0
    %1285 = vmatpush1.msra.mxu0 0.0
    %1286 = vmatprep.subr.mxu0 0.0
    %1287 = vmatpush1.msra.mxu0 0.0
    %1288 = vmatprep.subr.mxu0 0.0
    %1289 = vmatpush1.msra.mxu0 0.0
    %1290 = vmatprep.subr.mxu0 0.0
    %1291 = vmatpush1.msra.mxu0 0.0
    %1292 = vmatprep.mubr.f32.mxu0 0.0
    %1293 = vmatmul.mubr.f32.gmra.mrb[0].mxu0 %v1086
    %v1294 = vpop.f32.mrb[0].mxu0
    %v1295 = vadd.f32 0.0, %v1294
    %v1296 = vpop.f32.mrb[0].mxu0
    %1297 = vdwg.mxu0
    %1298 = vmatprep.subr.mxu0 0.0
    %1299 = vmatpush1.msra.mxu0 %v1022
    %1300 = vmatprep.subr.mxu0 0.0
    %1301 = vmatpush1.msra.mxu0 %v1078
    %1302 = vmatprep.subr.mxu0 0.0
    %1303 = vmatpush1.msra.mxu0 0.0
    %1304 = vmatprep.subr.mxu0 0.0
    %1305 = vmatpush1.msra.mxu0 0.0
    %1306 = vmatprep.subr.mxu0 0.0
    %1307 = vmatpush1.msra.mxu0 0.0
    %1308 = vmatprep.subr.mxu0 0.0
    %1309 = vmatpush1.msra.mxu0 0.0
    %1310 = vmatprep.subr.mxu0 0.0
    %1311 = vmatpush1.msra.mxu0 0.0
    %1312 = vmatprep.subr.mxu0 0.0
    %1313 = vmatpush1.msra.mxu0 0.0
    %1314 = vmatprep.subr.mxu0 0.0
    %1315 = vmatpush1.msra.mxu0 0.0
    %1316 = vmatprep.subr.mxu0 0.0
    %1317 = vmatpush1.msra.mxu0 0.0
    %1318 = vmatprep.subr.mxu0 0.0
    %1319 = vmatpush1.msra.mxu0 0.0
    %1320 = vmatprep.subr.mxu0 0.0
    %1321 = vmatpush1.msra.mxu0 0.0
    %1322 = vmatprep.subr.mxu0 0.0
    %1323 = vmatpush1.msra.mxu0 0.0
    %1324 = vmatprep.subr.mxu0 0.0
    %1325 = vmatpush1.msra.mxu0 0.0
    %1326 = vmatprep.subr.mxu0 0.0
    %1327 = vmatpush1.msra.mxu0 0.0
    %1328 = vmatprep.subr.mxu0 0.0
    %1329 = vmatpush1.msra.mxu0 0.0
    %1330 = vmatprep.subr.mxu0 0.0
    %1331 = vmatpush1.msra.mxu0 0.0
    %1332 = vmatprep.subr.mxu0 0.0
    %1333 = vmatpush1.msra.mxu0 0.0
    %1334 = vmatprep.subr.mxu0 0.0
    %1335 = vmatpush1.msra.mxu0 0.0
    %1336 = vmatprep.subr.mxu0 0.0
    %1337 = vmatpush1.msra.mxu0 0.0
    %1338 = vmatprep.subr.mxu0 0.0
    %1339 = vmatpush1.msra.mxu0 0.0
    %1340 = vmatprep.subr.mxu0 0.0
    %1341 = vmatpush1.msra.mxu0 0.0
    %1342 = vmatprep.subr.mxu0 0.0
    %1343 = vmatpush1.msra.mxu0 0.0
    %1344 = vmatprep.subr.mxu0 0.0
    %1345 = vmatpush1.msra.mxu0 0.0
    %1346 = vmatprep.subr.mxu0 0.0
    %1347 = vmatpush1.msra.mxu0 0.0
    %1348 = vmatprep.subr.mxu0 0.0
    %1349 = vmatpush1.msra.mxu0 0.0
    %1350 = vmatprep.subr.mxu0 0.0
    %1351 = vmatpush1.msra.mxu0 0.0
    %1352 = vmatprep.subr.mxu0 0.0
    %1353 = vmatpush1.msra.mxu0 0.0
    %1354 = vmatprep.subr.mxu0 0.0
    %1355 = vmatpush1.msra.mxu0 0.0
    %1356 = vmatprep.subr.mxu0 0.0
    %1357 = vmatpush1.msra.mxu0 0.0
    %1358 = vmatprep.subr.mxu0 0.0
    %1359 = vmatpush1.msra.mxu0 0.0
    %1360 = vmatprep.subr.mxu0 0.0
    %1361 = vmatpush1.msra.mxu0 0.0
    %1362 = vmatprep.mubr.f32.mxu0 0.0
    %1363 = vmatmul.mubr.f32.gmra.mrb[0].mxu0 %v1086
    %v1364 = vpop.f32.mrb[0].mxu0
    %v1365 = vadd.f32 0.0, %v1364
    %v1366 = vpop.f32.mrb[0].mxu0
    %1367 = vdwg.mxu0
    %1368 = vmatprep.subr.mxu0 0.0
    %1369 = vmatpush1.msra.mxu0 %v1023
    %1370 = vmatprep.subr.mxu0 0.0
    %1371 = vmatpush1.msra.mxu0 %v1079
    %1372 = vmatprep.subr.mxu0 0.0
    %1373 = vmatpush1.msra.mxu0 0.0
    %1374 = vmatprep.subr.mxu0 0.0
    %1375 = vmatpush1.msra.mxu0 0.0
    %1376 = vmatprep.subr.mxu0 0.0
    %1377 = vmatpush1.msra.mxu0 0.0
    %1378 = vmatprep.subr.mxu0 0.0
    %1379 = vmatpush1.msra.mxu0 0.0
    %1380 = vmatprep.subr.mxu0 0.0
    %1381 = vmatpush1.msra.mxu0 0.0
    %1382 = vmatprep.subr.mxu0 0.0
    %1383 = vmatpush1.msra.mxu0 0.0
    %1384 = vmatprep.subr.mxu0 0.0
    %1385 = vmatpush1.msra.mxu0 0.0
    %1386 = vmatprep.subr.mxu0 0.0
    %1387 = vmatpush1.msra.mxu0 0.0
    %1388 = vmatprep.subr.mxu0 0.0
    %1389 = vmatpush1.msra.mxu0 0.0
    %1390 = vmatprep.subr.mxu0 0.0
    %1391 = vmatpush1.msra.mxu0 0.0
    %1392 = vmatprep.subr.mxu0 0.0
    %1393 = vmatpush1.msra.mxu0 0.0
    %1394 = vmatprep.subr.mxu0 0.0
    %1395 = vmatpush1.msra.mxu0 0.0
    %1396 = vmatprep.subr.mxu0 0.0
    %1397 = vmatpush1.msra.mxu0 0.0
    %1398 = vmatprep.subr.mxu0 0.0
    %1399 = vmatpush1.msra.mxu0 0.0
    %1400 = vmatprep.subr.mxu0 0.0
    %1401 = vmatpush1.msra.mxu0 0.0
    %1402 = vmatprep.subr.mxu0 0.0
    %1403 = vmatpush1.msra.mxu0 0.0
    %1404 = vmatprep.subr.mxu0 0.0
    %1405 = vmatpush1.msra.mxu0 0.0
    %1406 = vmatprep.subr.mxu0 0.0
    %1407 = vmatpush1.msra.mxu0 0.0
    %1408 = vmatprep.subr.mxu0 0.0
    %1409 = vmatpush1.msra.mxu0 0.0
    %1410 = vmatprep.subr.mxu0 0.0
    %1411 = vmatpush1.msra.mxu0 0.0
    %1412 = vmatprep.subr.mxu0 0.0
    %1413 = vmatpush1.msra.mxu0 0.0
    %1414 = vmatprep.subr.mxu0 0.0
    %1415 = vmatpush1.msra.mxu0 0.0
    %1416 = vmatprep.subr.mxu0 0.0
    %1417 = vmatpush1.msra.mxu0 0.0
    %1418 = vmatprep.subr.mxu0 0.0
    %1419 = vmatpush1.msra.mxu0 0.0
    %1420 = vmatprep.subr.mxu0 0.0
    %1421 = vmatpush1.msra.mxu0 0.0
    %1422 = vmatprep.subr.mxu0 0.0
    %1423 = vmatpush1.msra.mxu0 0.0
    %1424 = vmatprep.subr.mxu0 0.0
    %1425 = vmatpush1.msra.mxu0 0.0
    %1426 = vmatprep.subr.mxu0 0.0
    %1427 = vmatpush1.msra.mxu0 0.0
    %1428 = vmatprep.subr.mxu0 0.0
    %1429 = vmatpush1.msra.mxu0 0.0
    %1430 = vmatprep.subr.mxu0 0.0
    %1431 = vmatpush1.msra.mxu0 0.0
    %1432 = vmatprep.mubr.f32.mxu0 0.0
    %1433 = vmatmul.mubr.f32.gmra.mrb[0].mxu0 %v1086
    %v1434 = vpop.f32.mrb[0].mxu0
    %v1435 = vadd.f32 0.0, %v1434
    %v1436 = vpop.f32.mrb[0].mxu0
    %1437 = vdwg.mxu0
    %1438 = vmatprep.subr.mxu0 0.0
    %1439 = vmatpush1.msra.mxu0 %v1024
    %1440 = vmatprep.subr.mxu0 0.0
    %1441 = vmatpush1.msra.mxu0 %v1080
    %1442 = vmatprep.subr.mxu0 0.0
    %1443 = vmatpush1.msra.mxu0 0.0
    %1444 = vmatprep.subr.mxu0 0.0
    %1445 = vmatpush1.msra.mxu0 0.0
    %1446 = vmatprep.subr.mxu0 0.0
    %1447 = vmatpush1.msra.mxu0 0.0
    %1448 = vmatprep.subr.mxu0 0.0
    %1449 = vmatpush1.msra.mxu0 0.0
    %1450 = vmatprep.subr.mxu0 0.0
    %1451 = vmatpush1.msra.mxu0 0.0
    %1452 = vmatprep.subr.mxu0 0.0
    %1453 = vmatpush1.msra.mxu0 0.0
    %1454 = vmatprep.subr.mxu0 0.0
    %1455 = vmatpush1.msra.mxu0 0.0
    %1456 = vmatprep.subr.mxu0 0.0
    %1457 = vmatpush1.msra.mxu0 0.0
    %1458 = vmatprep.subr.mxu0 0.0
    %1459 = vmatpush1.msra.mxu0 0.0
    %1460 = vmatprep.subr.mxu0 0.0
    %1461 = vmatpush1.msra.mxu0 0.0
    %1462 = vmatprep.subr.mxu0 0.0
    %1463 = vmatpush1.msra.mxu0 0.0
    %1464 = vmatprep.subr.mxu0 0.0
    %1465 = vmatpush1.msra.mxu0 0.0
    %1466 = vmatprep.subr.mxu0 0.0
    %1467 = vmatpush1.msra.mxu0 0.0
    %1468 = vmatprep.subr.mxu0 0.0
    %1469 = vmatpush1.msra.mxu0 0.0
    %1470 = vmatprep.subr.mxu0 0.0
    %1471 = vmatpush1.msra.mxu0 0.0
    %1472 = vmatprep.subr.mxu0 0.0
    %1473 = vmatpush1.msra.mxu0 0.0
    %1474 = vmatprep.subr.mxu0 0.0
    %1475 = vmatpush1.msra.mxu0 0.0
    %1476 = vmatprep.subr.mxu0 0.0
    %1477 = vmatpush1.msra.mxu0 0.0
    %1478 = vmatprep.subr.mxu0 0.0
    %1479 = vmatpush1.msra.mxu0 0.0
    %1480 = vmatprep.subr.mxu0 0.0
    %1481 = vmatpush1.msra.mxu0 0.0
    %1482 = vmatprep.subr.mxu0 0.0
    %1483 = vmatpush1.msra.mxu0 0.0
    %1484 = vmatprep.subr.mxu0 0.0
    %1485 = vmatpush1.msra.mxu0 0.0
    %1486 = vmatprep.subr.mxu0 0.0
    %1487 = vmatpush1.msra.mxu0 0.0
    %1488 = vmatprep.subr.mxu0 0.0
    %1489 = vmatpush1.msra.mxu0 0.0
    %1490 = vmatprep.subr.mxu0 0.0
    %1491 = vmatpush1.msra.mxu0 0.0
    %1492 = vmatprep.subr.mxu0 0.0
    %1493 = vmatpush1.msra.mxu0 0.0
    %1494 = vmatprep.subr.mxu0 0.0
    %1495 = vmatpush1.msra.mxu0 0.0
    %1496 = vmatprep.subr.mxu0 0.0
    %1497 = vmatpush1.msra.mxu0 0.0
    %1498 = vmatprep.subr.mxu0 0.0
    %1499 = vmatpush1.msra.mxu0 0.0
    %1500 = vmatprep.subr.mxu0 0.0
    %1501 = vmatpush1.msra.mxu0 0.0
    %1502 = vmatprep.mubr.f32.mxu0 0.0
    %1503 = vmatmul.mubr.f32.gmra.mrb[0].mxu0 %v1086
    %v1504 = vpop.f32.mrb[0].mxu0
    %v1505 = vadd.f32 0.0, %v1504
    %v1506 = vpop.f32.mrb[0].mxu0
    %1507 = vdwg.mxu0
    %1508 = vmatprep.subr.mxu0 0.0
    %1509 = vmatpush1.msra.mxu0 %v1025
    %1510 = vmatprep.subr.mxu0 0.0
    %1511 = vmatpush1.msra.mxu0 %v1081
    %1512 = vmatprep.subr.mxu0 0.0
    %1513 = vmatpush1.msra.mxu0 0.0
    %1514 = vmatprep.subr.mxu0 0.0
    %1515 = vmatpush1.msra.mxu0 0.0
    %1516 = vmatprep.subr.mxu0 0.0
    %1517 = vmatpush1.msra.mxu0 0.0
    %1518 = vmatprep.subr.mxu0 0.0
    %1519 = vmatpush1.msra.mxu0 0.0
    %1520 = vmatprep.subr.mxu0 0.0
    %1521 = vmatpush1.msra.mxu0 0.0
    %1522 = vmatprep.subr.mxu0 0.0
    %1523 = vmatpush1.msra.mxu0 0.0
    %1524 = vmatprep.subr.mxu0 0.0
    %1525 = vmatpush1.msra.mxu0 0.0
    %1526 = vmatprep.subr.mxu0 0.0
    %1527 = vmatpush1.msra.mxu0 0.0
    %1528 = vmatprep.subr.mxu0 0.0
    %1529 = vmatpush1.msra.mxu0 0.0
    %1530 = vmatprep.subr.mxu0 0.0
    %1531 = vmatpush1.msra.mxu0 0.0
    %1532 = vmatprep.subr.mxu0 0.0
    %1533 = vmatpush1.msra.mxu0 0.0
    %1534 = vmatprep.subr.mxu0 0.0
    %1535 = vmatpush1.msra.mxu0 0.0
    %1536 = vmatprep.subr.mxu0 0.0
    %1537 = vmatpush1.msra.mxu0 0.0
    %1538 = vmatprep.subr.mxu0 0.0
    %1539 = vmatpush1.msra.mxu0 0.0
    %1540 = vmatprep.subr.mxu0 0.0
    %1541 = vmatpush1.msra.mxu0 0.0
    %1542 = vmatprep.subr.mxu0 0.0
    %1543 = vmatpush1.msra.mxu0 0.0
    %1544 = vmatprep.subr.mxu0 0.0
    %1545 = vmatpush1.msra.mxu0 0.0
    %1546 = vmatprep.subr.mxu0 0.0
    %1547 = vmatpush1.msra.mxu0 0.0
    %1548 = vmatprep.subr.mxu0 0.0
    %1549 = vmatpush1.msra.mxu0 0.0
    %1550 = vmatprep.subr.mxu0 0.0
    %1551 = vmatpush1.msra.mxu0 0.0
    %1552 = vmatprep.subr.mxu0 0.0
    %1553 = vmatpush1.msra.mxu0 0.0
    %1554 = vmatprep.subr.mxu0 0.0
    %1555 = vmatpush1.msra.mxu0 0.0
    %1556 = vmatprep.subr.mxu0 0.0
    %1557 = vmatpush1.msra.mxu0 0.0
    %1558 = vmatprep.subr.mxu0 0.0
    %1559 = vmatpush1.msra.mxu0 0.0
    %1560 = vmatprep.subr.mxu0 0.0
    %1561 = vmatpush1.msra.mxu0 0.0
    %1562 = vmatprep.subr.mxu0 0.0
    %1563 = vmatpush1.msra.mxu0 0.0
    %1564 = vmatprep.subr.mxu0 0.0
    %1565 = vmatpush1.msra.mxu0 0.0
    %1566 = vmatprep.subr.mxu0 0.0
    %1567 = vmatpush1.msra.mxu0 0.0
    %1568 = vmatprep.subr.mxu0 0.0
    %1569 = vmatpush1.msra.mxu0 0.0
    %1570 = vmatprep.subr.mxu0 0.0
    %1571 = vmatpush1.msra.mxu0 0.0
    %1572 = vmatprep.mubr.f32.mxu0 0.0
    %1573 = vmatmul.mubr.f32.gmra.mrb[0].mxu0 %v1086
    %v1574 = vpop.f32.mrb[0].mxu0
    %v1575 = vadd.f32 0.0, %v1574
    %v1576 = vpop.f32.mrb[0].mxu0
    %1577 = vdwg.mxu0
    %1578 = vmatprep.subr.mxu0 0.0
    %1579 = vmatpush1.msra.mxu0 %v1026
    %1580 = vmatprep.subr.mxu0 0.0
    %1581 = vmatpush1.msra.mxu0 %v1082
    %1582 = vmatprep.subr.mxu0 0.0
    %1583 = vmatpush1.msra.mxu0 0.0
    %1584 = vmatprep.subr.mxu0 0.0
    %1585 = vmatpush1.msra.mxu0 0.0
    %1586 = vmatprep.subr.mxu0 0.0
    %1587 = vmatpush1.msra.mxu0 0.0
    %1588 = vmatprep.subr.mxu0 0.0
    %1589 = vmatpush1.msra.mxu0 0.0
    %1590 = vmatprep.subr.mxu0 0.0
    %1591 = vmatpush1.msra.mxu0 0.0
    %1592 = vmatprep.subr.mxu0 0.0
    %1593 = vmatpush1.msra.mxu0 0.0
    %1594 = vmatprep.subr.mxu0 0.0
    %1595 = vmatpush1.msra.mxu0 0.0
    %1596 = vmatprep.subr.mxu0 0.0
    %1597 = vmatpush1.msra.mxu0 0.0
    %1598 = vmatprep.subr.mxu0 0.0
    %1599 = vmatpush1.msra.mxu0 0.0
    %1600 = vmatprep.subr.mxu0 0.0
    %1601 = vmatpush1.msra.mxu0 0.0
    %1602 = vmatprep.subr.mxu0 0.0
    %1603 = vmatpush1.msra.mxu0 0.0
    %1604 = vmatprep.subr.mxu0 0.0
    %1605 = vmatpush1.msra.mxu0 0.0
    %1606 = vmatprep.subr.mxu0 0.0
    %1607 = vmatpush1.msra.mxu0 0.0
    %1608 = vmatprep.subr.mxu0 0.0
    %1609 = vmatpush1.msra.mxu0 0.0
    %1610 = vmatprep.subr.mxu0 0.0
    %1611 = vmatpush1.msra.mxu0 0.0
    %1612 = vmatprep.subr.mxu0 0.0
    %1613 = vmatpush1.msra.mxu0 0.0
    %1614 = vmatprep.subr.mxu0 0.0
    %1615 = vmatpush1.msra.mxu0 0.0
    %1616 = vmatprep.subr.mxu0 0.0
    %1617 = vmatpush1.msra.mxu0 0.0
    %1618 = vmatprep.subr.mxu0 0.0
    %1619 = vmatpush1.msra.mxu0 0.0
    %1620 = vmatprep.subr.mxu0 0.0
    %1621 = vmatpush1.msra.mxu0 0.0
    %1622 = vmatprep.subr.mxu0 0.0
    %1623 = vmatpush1.msra.mxu0 0.0
    %1624 = vmatprep.subr.mxu0 0.0
    %1625 = vmatpush1.msra.mxu0 0.0
    %1626 = vmatprep.subr.mxu0 0.0
    %1627 = vmatpush1.msra.mxu0 0.0
    %1628 = vmatprep.subr.mxu0 0.0
    %1629 = vmatpush1.msra.mxu0 0.0
    %1630 = vmatprep.subr.mxu0 0.0
    %1631 = vmatpush1.msra.mxu0 0.0
    %1632 = vmatprep.subr.mxu0 0.0
    %1633 = vmatpush1.msra.mxu0 0.0
    %1634 = vmatprep.subr.mxu0 0.0
    %1635 = vmatpush1.msra.mxu0 0.0
    %1636 = vmatprep.subr.mxu0 0.0
    %1637 = vmatpush1.msra.mxu0 0.0
    %1638 = vmatprep.subr.mxu0 0.0
    %1639 = vmatpush1.msra.mxu0 0.0
    %1640 = vmatprep.subr.mxu0 0.0
    %1641 = vmatpush1.msra.mxu0 0.0
    %1642 = vmatprep.mubr.f32.mxu0 0.0
    %1643 = vmatmul.mubr.f32.gmra.mrb[0].mxu0 %v1086
    %v1644 = vpop.f32.mrb[0].mxu0
    %v1645 = vadd.f32 0.0, %v1644
    %v1646 = vpop.f32.mrb[0].mxu0
    %1647 = vdwg.mxu0
    %1648 = vst [vmem:[#allocation8] sm:$0xff] %v1155
    %1649 = vst [vmem:[#allocation8 + $0x8] sm:$0xff] %v1225
    %1650 = vst [vmem:[#allocation8 + $0x10] sm:$0xff] %v1295
    %1651 = vst [vmem:[#allocation8 + $0x18] sm:$0xff] %v1365
    %1652 = vst [vmem:[#allocation8 + $0x20] sm:$0xff] %v1435
    %1653 = vst [vmem:[#allocation8 + $0x28] sm:$0xff] %v1505
    %1654 = vst [vmem:[#allocation8 + $0x30] sm:$0xff] %v1575
    %1655 = vst [vmem:[#allocation8 + $0x38] sm:$0xff] %v1645
    // Predicated region
    $region26: #{tpu_custom_call.1} parent=1 // pred_check
      _
    $region27: #{tpu_custom_call.1} parent=1 // pred_check_branch
      %1657 = sbr.rel (0) target = $region29
    $region28: #{tpu_custom_call.1} parent=1 // pred_region
      %s1659 = ssub.s32 1024, 1024
      %1660 = vsyncadd [#allocation4], %s1659
      %s1661 = sshll.u32 [#allocation8], 4
      %s1662 = int_to_ptr.vmem [resolvable:$true] %s1661
      %1667 = dma.vmem_to_hbm [thread:$0]  %s1662, 1024, %s3, [#allocation4], 128, 128, 8
    $region29: #{tpu_custom_call.1} parent=1 // pred_fallthru
      _
    // Predicated region
    $region30: #{tpu_custom_call.1} parent=1 // pred_check
      _
    $region31: #{tpu_custom_call.1} parent=1 // pred_check_branch
      %1669 = sbr.rel (0) target = $region33
    $region32: #{tpu_custom_call.1} parent=1 // pred_region
      %1670 = dma.done [#allocation4], 1024
    $region33: #{tpu_custom_call.1} parent=1 // pred_fallthru
      _
    %1671 = vsyncpa [#allocation3], 1
    %1672 = vsyncpa [#allocation6], 1
    %1673 = vsyncpa [#allocation4], 1

</llo_original>
